<compile_context>
chip_gen: v7x
topology: tpu7x:2x2x1
jax: 0.10.0
libtpu: 0.0.40
codegen_flags: <defaults>
</compile_context>

<pallas_src>
import jax
import jax.numpy as jnp
from jax.experimental import pallas as pl
from jax.experimental.pallas import tpu as pltpu

LANE = 128
SUBLANE = 8


def _rup(v, m):
    return ((v + m - 1) // m) * m


def _pad_to(a, shape):
    return jnp.pad(a, [(0, s - d) for d, s in zip(a.shape, shape)])


def _spec(shape):
    nd = len(shape)
    return pl.BlockSpec(shape, lambda i, _nd=nd: (0,) * _nd)


# ----------------------------------------------------------------------------
# Parameter stacking layout (shared by wrapper and kernel factory)
# ----------------------------------------------------------------------------

def _param_layout(L):
    # weight stack: every padded weight matrix is exactly [128, 128] (all real
    # feature dims <= 128), so they stack into one [n_w, 128, 128] bf16 array.
    w_idx = {"ne_w0": 0, "ne_w1": 1, "ee_w0": 2, "ee_w1": 3}
    for l in range(L):
        w_idx[f"cw1_{l}"] = 4 + 2 * l
        w_idx[f"cw2_{l}"] = 5 + 2 * l
    b = 4 + 2 * L
    w_idx.update({"o_w0": b, "o_w1": b + 1, "o_w2": b + 2})
    n_w = 7 + 2 * L

    # vector-param stack: every bias / BN scale / BN shift / LN gamma / LN beta,
    # padded to 128 lanes, one row each of a [n_v, 128] f32 array.
    v_idx = {"ne_b0": 0, "ne_s0": 1, "ne_t0": 2, "ne_b1": 3,
             "ee_b0": 4, "ee_s0": 5, "ee_t0": 6, "ee_b1": 7}
    for l in range(L):
        b = 8 + 6 * l
        v_idx[f"ln_g_{l}"] = b + 0
        v_idx[f"ln_b_{l}"] = b + 1
        v_idx[f"cb1_{l}"] = b + 2
        v_idx[f"clng_{l}"] = b + 3
        v_idx[f"clnb_{l}"] = b + 4
        v_idx[f"cb2_{l}"] = b + 5
    b = 8 + 6 * L
    v_idx.update({"o_b0": b, "o_s0": b + 1, "o_t0": b + 2, "o_b1": b + 3,
                  "o_s1": b + 4, "o_t1": b + 5, "o_b2": b + 6})
    n_v = 15 + 6 * L
    return w_idx, v_idx, n_w, n_v


# ----------------------------------------------------------------------------
# Fused Pallas kernel (whole forward pass)
# ----------------------------------------------------------------------------

def _make_fused_kernel(num_conv_layers, c_real, e_real, w_idx, v_idx):
    """Kernel factory; closes over static layer count, the *real* (unpadded)
    channel count C, the real edge count E, and the parameter-stack layout."""
    L = num_conv_layers
    C = c_real
    inv_c = 1.0 / float(C)        # pre-norm LayerNorm over C real features
    inv_h = 1.0 / float(2 * C)    # GENConv-internal LayerNorm over 2C real features

    def kernel(x_ref, ea_ref, gsrc_ref, sdst_ref, w_ref, v_ref, o_ref):
        f32, bf16 = jnp.float32, jnp.bfloat16

        def W(name):                                   # [128, 128] bf16 weight
            return w_ref[w_idx[name]]

        def V(name):                                   # [1, 128] f32 vector param
            return v_ref[pl.ds(v_idx[name], 1), :]

        def lin(x, wn, bn):
            return jnp.dot(x.astype(bf16), W(wn), preferred_element_type=f32) + V(bn)

        def lin_bn_relu(x, wn, bn, sn, tn):
            y = lin(x, wn, bn)
            return jnp.maximum(y * V(sn) + V(tn), 0.0)

        def layernorm_relu(y, inv_dim, g, b):
            # Padded feature lanes of y are exactly zero, so full-width sums with
            # the real-dim divisor give the exact unpadded statistics.
            mu = jnp.sum(y, axis=-1, keepdims=True) * inv_dim
            ex2 = jnp.sum(y * y, axis=-1, keepdims=True) * inv_dim
            var = ex2 - mu * mu
            yn = (y - mu) * jax.lax.rsqrt(var + 1e-5)
            return jnp.maximum(yn * g + b, 0.0)

        # Incidence matrices loaded once, reused by every conv layer.  bf16 is
        # exact for 0/1 values; accumulation on the MXU is f32.
        gsrc = gsrc_ref[...]          # [Ep, Np]  one-hot of edge sources
        sdst = sdst_ref[...]          # [Np, Ep]  one-hot^T of edge destinations
        Ep, Np = gsrc.shape

        # Hoisted lane / row masks (reused by every layer).
        lane_e = jax.lax.broadcasted_iota(jnp.int32, (Ep, LANE), 1) < C
        lane_n = jax.lax.broadcasted_iota(jnp.int32, (Np, LANE), 1) < C
        edge_valid = None
        if Ep > e_real:  # mask padded edge rows out of the softmax statistics
            edge_valid = jax.lax.broadcasted_iota(jnp.int32, (Ep, LANE), 0) < e_real

        def genconv(h, e, l):
            # gather x[src_e] as a one-hot matmul (bf16 operands, f32 acc)
            x_src = jnp.dot(gsrc, h.astype(bf16), preferred_element_type=f32)  # [Ep, 128]
            msg = jnp.maximum(x_src + e, 0.0) + 1e-7
            # Per-feature max over real edges.  A constant shift per feature is
            # exactly the per-destination-group shift in exact arithmetic and
            # keeps exp arguments <= 0 (overflow-safe).
            msg_for_max = msg if edge_valid is None else jnp.where(edge_valid, msg, -jnp.inf)
            m = jnp.max(msg_for_max, axis=0, keepdims=True)
            w = jnp.exp(msg - m)                                                # [Ep, 128]
            if edge_valid is not None:
                w = jnp.where(edge_valid, w, 0.0)
            # Pack numerator (w*msg) into lanes [0,C) and denominator (w) into
            # lanes [C,2C) of ONE RHS -> a single scatter matmul (softmax denom
            # is constant within a destination group, so num/den factorizes).
            wm = jnp.where(lane_e, w * msg, 0.0)
            wd = pltpu.roll(jnp.where(lane_e, w, 0.0), shift=C, axis=1)
            scat = jnp.dot(sdst, (wm + wd).astype(bf16),
                           preferred_element_type=f32)                          # [Np, 128]
            den = pltpu.roll(scat, shift=LANE - C, axis=1)   # denom -> lanes [0,C)
            agg = jnp.where(lane_n,
                            scat * pl.reciprocal(den + 1e-16, approx=True), 0.0)
            # GENConv internal MLP: Lin(C,2C) -> LayerNorm -> ReLU -> Lin(2C,C)
            y = agg + h
            y = jnp.dot(y.astype(bf16), W(f"cw1_{l}"),
                        preferred_element_type=f32) + V(f"cb1_{l}")
            y = layernorm_relu(y, inv_h, V(f"clng_{l}"), V(f"clnb_{l}"))
            y = jnp.dot(y.astype(bf16), W(f"cw2_{l}"),
                        preferred_element_type=f32) + V(f"cb2_{l}")
            return y

        # node / edge encoders (dropout = identity in eval; BN folded to affine)
        h = lin_bn_relu(x_ref[...], "ne_w0", "ne_b0", "ne_s0", "ne_t0")
        h = lin(h, "ne_w1", "ne_b1")
        e = lin_bn_relu(ea_ref[...], "ee_w0", "ee_b0", "ee_s0", "ee_t0")
        e = lin(e, "ee_w1", "ee_b1")

        # layer 0: bare GENConv (no pre-norm, no residual)
        h = genconv(h, e, 0)

        # layers 1..L-1: res+ blocks   x <- x + conv(relu(LayerNorm(x)))
        for l in range(1, L):
            pre = layernorm_relu(h, inv_c, V(f"ln_g_{l}"), V(f"ln_b_{l}"))
            h = h + genconv(pre, e, l)

        # out MLP: Lin -> BN -> ReLU -> Lin -> BN -> ReLU -> Lin (lane-dense store)
        y = lin_bn_relu(h, "o_w0", "o_b0", "o_s0", "o_t0")
        y = lin_bn_relu(y, "o_w1", "o_b1", "o_s1", "o_t1")
        o_ref[...] = lin(y, "o_w2", "o_b2")

    return kernel


# ----------------------------------------------------------------------------
# Parameter construction (deterministic, synthetic, unpadded "PyTorch" shapes)
# ----------------------------------------------------------------------------

def _dense(key, fan_in, fan_out):
    k1, k2 = jax.random.split(key)
    w = jax.random.normal(k1, (fan_in, fan_out), jnp.float32) / jnp.sqrt(float(fan_in))
    b = 0.01 * jax.random.normal(k2, (1, fan_out), jnp.float32)
    return w, b


def _affine(key, dim):
    k1, k2 = jax.random.split(key)
    scale = 1.0 + 0.01 * jax.random.normal(k1, (1, dim), jnp.float32)
    shift = 0.01 * jax.random.normal(k2, (1, dim), jnp.float32)
    return scale, shift


def init_params(key, *, num_node_attr, num_edge_attr, encoder_hidden_channels,
                conv_hidden_channels, conv_num_layers, num_classes):
    C, He = conv_hidden_channels, encoder_hidden_channels
    keys = iter(jax.random.split(key, 64))
    p = {}
    # node encoder MLP: [Fn, C, C]
    p["ne_w0"], p["ne_b0"] = _dense(next(keys), num_node_attr, C)
    p["ne_s0"], p["ne_t0"] = _affine(next(keys), C)
    p["ne_w1"], p["ne_b1"] = _dense(next(keys), C, C)
    # edge encoder MLP: [Fe, He, C]
    p["ee_w0"], p["ee_b0"] = _dense(next(keys), num_edge_attr, He)
    p["ee_s0"], p["ee_t0"] = _affine(next(keys), He)
    p["ee_w1"], p["ee_b1"] = _dense(next(keys), He, C)
    # DeepGCN layers (each: outer LayerNorm + GENConv MLP [C, 2C, C])
    p["layers"] = []
    for _ in range(conv_num_layers):
        lp = {}
        lp["ln_g"], lp["ln_b"] = _affine(next(keys), C)
        lp["w1"], lp["b1"] = _dense(next(keys), C, 2 * C)
        lp["lng"], lp["lnb"] = _affine(next(keys), 2 * C)
        lp["w2"], lp["b2"] = _dense(next(keys), 2 * C, C)
        p["layers"].append(lp)
    # out MLP: [C, C//2, C//4, num_classes]
    p["o_w0"], p["o_b0"] = _dense(next(keys), C, C // 2)
    p["o_s0"], p["o_t0"] = _affine(next(keys), C // 2)
    p["o_w1"], p["o_b1"] = _dense(next(keys), C // 2, C // 4)
    p["o_s1"], p["o_t1"] = _affine(next(keys), C // 4)
    p["o_w2"], p["o_b2"] = _dense(next(keys), C // 4, num_classes)
    return p


# ----------------------------------------------------------------------------
# Forward pass (glue: pad, build incidence, stack params, one pallas_call)
# ----------------------------------------------------------------------------

def gnn_tracker_forward(p, x, edge_attr, edge_index, *, conv_hidden_channels,
                        encoder_hidden_channels, num_classes):
    N, Fn = x.shape
    E, Fe = edge_attr.shape
    C = conv_hidden_channels
    He = encoder_hidden_channels
    L = len(p["layers"])

    # The fully fused, VMEM-resident path assumes every feature width fits one
    # 128-lane row and the num/den lane-packing trick needs 2C <= 128.
    assert max(Fn, Fe, He, 2 * C, num_classes) <= LANE

    Np, Ep = _rup(N, SUBLANE), _rup(E, SUBLANE)

    src, dst = edge_index[0], edge_index[1]
    # bf16 one-hot incidence matrices (exact for 0/1 values).
    g_src = _pad_to(jax.nn.one_hot(src, Np, dtype=jnp.bfloat16), (Ep, Np))     # [E, N]
    s_dst = _pad_to(jax.nn.one_hot(dst, Np, dtype=jnp.bfloat16), (Ep, Np)).T   # [N, E]

    x_p = _pad_to(x, (Np, LANE))
    ea_p = _pad_to(edge_attr, (Ep, LANE))

    w_idx, v_idx, n_w, n_v = _param_layout(L)

    def wpad(a):   # weight matrix -> [128,128] bf16 (zero-padded, padding inert)
        return _pad_to(a, (LANE, LANE)).astype(jnp.bfloat16)

    def vpad(a):   # (1, d) vector param -> [128] f32
        return _pad_to(a.reshape(-1), (LANE,))

    w_rows = [None] * n_w
    w_rows[w_idx["ne_w0"]] = wpad(p["ne_w0"]); w_rows[w_idx["ne_w1"]] = wpad(p["ne_w1"])
    w_rows[w_idx["ee_w0"]] = wpad(p["ee_w0"]); w_rows[w_idx["ee_w1"]] = wpad(p["ee_w1"])
    for l, lp in enumerate(p["layers"]):
        w_rows[w_idx[f"cw1_{l}"]] = wpad(lp["w1"])
        w_rows[w_idx[f"cw2_{l}"]] = wpad(lp["w2"])
    w_rows[w_idx["o_w0"]] = wpad(p["o_w0"]); w_rows[w_idx["o_w1"]] = wpad(p["o_w1"])
    w_rows[w_idx["o_w2"]] = wpad(p["o_w2"])
    w_stack = jnp.stack(w_rows)                                  # [n_w, 128, 128] bf16

    v_rows = [None] * n_v
    for name in ("ne_b0", "ne_s0", "ne_t0", "ne_b1",
                 "ee_b0", "ee_s0", "ee_t0", "ee_b1",
                 "o_b0", "o_s0", "o_t0", "o_b1", "o_s1", "o_t1", "o_b2"):
        v_rows[v_idx[name]] = vpad(p[name])
    for l, lp in enumerate(p["layers"]):
        v_rows[v_idx[f"ln_g_{l}"]] = vpad(lp["ln_g"])
        v_rows[v_idx[f"ln_b_{l}"]] = vpad(lp["ln_b"])
        v_rows[v_idx[f"cb1_{l}"]] = vpad(lp["b1"])
        v_rows[v_idx[f"clng_{l}"]] = vpad(lp["lng"])
        v_rows[v_idx[f"clnb_{l}"]] = vpad(lp["lnb"])
        v_rows[v_idx[f"cb2_{l}"]] = vpad(lp["b2"])
    v_stack = _pad_to(jnp.stack(v_rows), (_rup(n_v, SUBLANE), LANE))  # [Kp, 128] f32

    args = [x_p, ea_p, g_src, s_dst, w_stack, v_stack]

    kernel = _make_fused_kernel(L, C, E, w_idx, v_idx)
    out = pl.pallas_call(
        kernel,
        out_shape=jax.ShapeDtypeStruct((Np, LANE), jnp.float32),
        grid=(1,),
        in_specs=[_spec(a.shape) for a in args],
        out_specs=_spec((Np, LANE)),
        compiler_params=pltpu.CompilerParams(
            dimension_semantics=("arbitrary",),
            # Explicit scoped-VMEM budget (v5e default is only 16 MiB).  For
            # larger graphs, re-derive against per-generation physical VMEM
            # (64 MiB on v7x, 128 MiB on v5e/v6e).
            vmem_limit_bytes=32 * 1024 * 1024),
    )(*args)

    return out[:N, :num_classes]


# ----------------------------------------------------------------------------
# Demo
# ----------------------------------------------------------------------------

if __name__ == "__main__":
    # Module hyperparameters (synthetic small config)
    num_node_attr = 4
    num_edge_attr = 3
    encoder_hidden_channels = 16
    encoder_num_layers = 2          # -> 2-layer encoders as built above
    conv_hidden_channels = 32
    conv_num_layers = 3
    num_classes = 1
    # dropout_rate is irrelevant in eval mode.

    N, E = 16, 32

    key = jax.random.PRNGKey(0)
    k_x, k_e, k_src, k_dst, k_params = jax.random.split(key, 5)

    x = jax.random.normal(k_x, (N, num_node_attr), jnp.float32)
    edge_attr = jax.random.normal(k_e, (E, num_edge_attr), jnp.float32)
    src = jax.random.randint(k_src, (E,), 0, N, dtype=jnp.int32)
    dst = jax.random.randint(k_dst, (E,), 0, N, dtype=jnp.int32)
    edge_index = jnp.stack([src, dst], axis=0)  # [2, E], PyG convention (src, dst)

    params = init_params(
        k_params,
        num_node_attr=num_node_attr,
        num_edge_attr=num_edge_attr,
        encoder_hidden_channels=encoder_hidden_channels,
        conv_hidden_channels=conv_hidden_channels,
        conv_num_layers=conv_num_layers,
        num_classes=num_classes,
    )

    out = gnn_tracker_forward(
        params, x, edge_attr, edge_index,
        conv_hidden_channels=conv_hidden_channels,
        encoder_hidden_channels=encoder_hidden_channels,
        num_classes=num_classes,
    )
    out = jax.block_until_ready(out)
    assert out.shape == (N, num_classes) and out.dtype == jnp.float32
    assert bool(jnp.all(jnp.isfinite(out)))
    print("KERNEL_OK")
</pallas_src>

<mosaic_0001>
module attributes {stable_mosaic.version = 11 : i64} {
  func.func @kernel(%arg0: i32, %arg1: memref<16x128xf32, #tpu.memory_space<vmem>>, %arg2: memref<32x128xf32, #tpu.memory_space<vmem>>, %arg3: memref<32x16xbf16, #tpu.memory_space<vmem>>, %arg4: memref<16x32xbf16, #tpu.memory_space<vmem>>, %arg5: memref<13x128x128xbf16, #tpu.memory_space<vmem>>, %arg6: memref<40x128xf32, #tpu.memory_space<vmem>>, %arg7: memref<16x128xf32, #tpu.memory_space<vmem>>) attributes {dimension_semantics = [#tpu.dimension_semantics<arbitrary>], iteration_bounds = array<i64: 1>, scalar_prefetch = 0 : i64, scratch_operands = 0 : i64, tpu.core_type = #tpu.core_type<tc>, window_params = [{pipeline_mode = #tpu.pipeline_mode<synchronous>, transform_indices = @transform_0, window_bounds = array<i64: 16, 128>}, {pipeline_mode = #tpu.pipeline_mode<synchronous>, transform_indices = @transform_1, window_bounds = array<i64: 32, 128>}, {pipeline_mode = #tpu.pipeline_mode<synchronous>, transform_indices = @transform_2, window_bounds = array<i64: 32, 16>}, {pipeline_mode = #tpu.pipeline_mode<synchronous>, transform_indices = @transform_3, window_bounds = array<i64: 16, 32>}, {pipeline_mode = #tpu.pipeline_mode<synchronous>, transform_indices = @transform_4, window_bounds = array<i64: 13, 128, 128>}, {pipeline_mode = #tpu.pipeline_mode<synchronous>, transform_indices = @transform_5, window_bounds = array<i64: 40, 128>}, {pipeline_mode = #tpu.pipeline_mode<synchronous>, transform_indices = @transform_6, window_bounds = array<i64: 16, 128>}]} {
    %c0 = arith.constant 0 : index
    %c0_0 = arith.constant 0 : index
    %0 = vector.load %arg3[%c0, %c0_0] : memref<32x16xbf16, #tpu.memory_space<vmem>>, vector<32x16xbf16>
    %c0_1 = arith.constant 0 : index
    %c0_2 = arith.constant 0 : index
    %1 = vector.load %arg4[%c0_1, %c0_2] : memref<16x32xbf16, #tpu.memory_space<vmem>>, vector<16x32xbf16>
    %2 = tpu.iota {dimensions = array<i32: 1>} : vector<32x128xi32>
    %c32_i32 = arith.constant 32 : i32
    %3 = vector.broadcast %c32_i32 : i32 to vector<32x128xi32>
    %4 = arith.cmpi slt, %2, %3 : vector<32x128xi32>
    %5 = tpu.iota {dimensions = array<i32: 1>} : vector<16x128xi32>
    %c32_i32_3 = arith.constant 32 : i32
    %6 = vector.broadcast %c32_i32_3 : i32 to vector<16x128xi32>
    %7 = arith.cmpi slt, %5, %6 : vector<16x128xi32>
    %c0_4 = arith.constant 0 : index
    %c0_5 = arith.constant 0 : index
    %8 = vector.load %arg1[%c0_4, %c0_5] : memref<16x128xf32, #tpu.memory_space<vmem>>, vector<16x128xf32>
    %9 = arith.truncf %8 : vector<16x128xf32> to vector<16x128xbf16>
    %c0_6 = arith.constant 0 : index
    %c0_7 = arith.constant 0 : index
    %c0_8 = arith.constant 0 : index
    %10 = vector.load %arg5[%c0_6, %c0_7, %c0_8] : memref<13x128x128xbf16, #tpu.memory_space<vmem>>, vector<1x128x128xbf16>
    %11 = vector.shape_cast %10 : vector<1x128x128xbf16> to vector<128x128xbf16>
    %cst = arith.constant dense<0.000000e+00> : vector<16x128xf32>
    %12 = tpu.matmul %9, %11, %cst {dimension_numbers = #tpu.dot_dimension_numbers<[1], [0], [0], [1], [0, 0, 1, 1], [], []>} : vector<16x128xbf16>, vector<128x128xbf16>, vector<16x128xf32> -> vector<16x128xf32>
    %c0_9 = arith.constant 0 : index
    %c0_10 = arith.constant 0 : index
    %13 = vector.load %arg6[%c0_9, %c0_10] : memref<40x128xf32, #tpu.memory_space<vmem>>, vector<1x128xf32>
    %14 = vector.broadcast %13 : vector<1x128xf32> to vector<16x128xf32>
    %15 = arith.addf %12, %14 : vector<16x128xf32>
    %c1 = arith.constant 1 : index
    %c0_11 = arith.constant 0 : index
    %16 = vector.load %arg6[%c1, %c0_11] : memref<40x128xf32, #tpu.memory_space<vmem>>, vector<1x128xf32>
    %17 = vector.broadcast %16 : vector<1x128xf32> to vector<16x128xf32>
    %18 = arith.mulf %15, %17 : vector<16x128xf32>
    %c2 = arith.constant 2 : index
    %c0_12 = arith.constant 0 : index
    %19 = vector.load %arg6[%c2, %c0_12] : memref<40x128xf32, #tpu.memory_space<vmem>>, vector<1x128xf32>
    %20 = vector.broadcast %19 : vector<1x128xf32> to vector<16x128xf32>
    %21 = arith.addf %18, %20 : vector<16x128xf32>
    %cst_13 = arith.constant 0.000000e+00 : f32
    %22 = vector.broadcast %cst_13 : f32 to vector<16x128xf32>
    %23 = arith.maximumf %21, %22 : vector<16x128xf32>
    %24 = arith.truncf %23 : vector<16x128xf32> to vector<16x128xbf16>
    %c1_14 = arith.constant 1 : index
    %c0_15 = arith.constant 0 : index
    %c0_16 = arith.constant 0 : index
    %25 = vector.load %arg5[%c1_14, %c0_15, %c0_16] : memref<13x128x128xbf16, #tpu.memory_space<vmem>>, vector<1x128x128xbf16>
    %26 = vector.shape_cast %25 : vector<1x128x128xbf16> to vector<128x128xbf16>
    %cst_17 = arith.constant dense<0.000000e+00> : vector<16x128xf32>
    %27 = tpu.matmul %24, %26, %cst_17 {dimension_numbers = #tpu.dot_dimension_numbers<[1], [0], [0], [1], [0, 0, 1, 1], [], []>} : vector<16x128xbf16>, vector<128x128xbf16>, vector<16x128xf32> -> vector<16x128xf32>
    %c3 = arith.constant 3 : index
    %c0_18 = arith.constant 0 : index
    %28 = vector.load %arg6[%c3, %c0_18] : memref<40x128xf32, #tpu.memory_space<vmem>>, vector<1x128xf32>
    %29 = vector.broadcast %28 : vector<1x128xf32> to vector<16x128xf32>
    %30 = arith.addf %27, %29 : vector<16x128xf32>
    %c0_19 = arith.constant 0 : index
    %c0_20 = arith.constant 0 : index
    %31 = vector.load %arg2[%c0_19, %c0_20] : memref<32x128xf32, #tpu.memory_space<vmem>>, vector<32x128xf32>
    %32 = arith.truncf %31 : vector<32x128xf32> to vector<32x128xbf16>
    %c2_21 = arith.constant 2 : index
    %c0_22 = arith.constant 0 : index
    %c0_23 = arith.constant 0 : index
    %33 = vector.load %arg5[%c2_21, %c0_22, %c0_23] : memref<13x128x128xbf16, #tpu.memory_space<vmem>>, vector<1x128x128xbf16>
    %34 = vector.shape_cast %33 : vector<1x128x128xbf16> to vector<128x128xbf16>
    %cst_24 = arith.constant dense<0.000000e+00> : vector<32x128xf32>
    %35 = tpu.matmul %32, %34, %cst_24 {dimension_numbers = #tpu.dot_dimension_numbers<[1], [0], [0], [1], [0, 0, 1, 1], [], []>} : vector<32x128xbf16>, vector<128x128xbf16>, vector<32x128xf32> -> vector<32x128xf32>
    %c4 = arith.constant 4 : index
    %c0_25 = arith.constant 0 : index
    %36 = vector.load %arg6[%c4, %c0_25] : memref<40x128xf32, #tpu.memory_space<vmem>>, vector<1x128xf32>
    %37 = vector.broadcast %36 : vector<1x128xf32> to vector<32x128xf32>
    %38 = arith.addf %35, %37 : vector<32x128xf32>
    %c5 = arith.constant 5 : index
    %c0_26 = arith.constant 0 : index
    %39 = vector.load %arg6[%c5, %c0_26] : memref<40x128xf32, #tpu.memory_space<vmem>>, vector<1x128xf32>
    %40 = vector.broadcast %39 : vector<1x128xf32> to vector<32x128xf32>
    %41 = arith.mulf %38, %40 : vector<32x128xf32>
    %c6 = arith.constant 6 : index
    %c0_27 = arith.constant 0 : index
    %42 = vector.load %arg6[%c6, %c0_27] : memref<40x128xf32, #tpu.memory_space<vmem>>, vector<1x128xf32>
    %43 = vector.broadcast %42 : vector<1x128xf32> to vector<32x128xf32>
    %44 = arith.addf %41, %43 : vector<32x128xf32>
    %cst_28 = arith.constant 0.000000e+00 : f32
    %45 = vector.broadcast %cst_28 : f32 to vector<32x128xf32>
    %46 = arith.maximumf %44, %45 : vector<32x128xf32>
    %47 = arith.truncf %46 : vector<32x128xf32> to vector<32x128xbf16>
    %c3_29 = arith.constant 3 : index
    %c0_30 = arith.constant 0 : index
    %c0_31 = arith.constant 0 : index
    %48 = vector.load %arg5[%c3_29, %c0_30, %c0_31] : memref<13x128x128xbf16, #tpu.memory_space<vmem>>, vector<1x128x128xbf16>
    %49 = vector.shape_cast %48 : vector<1x128x128xbf16> to vector<128x128xbf16>
    %cst_32 = arith.constant dense<0.000000e+00> : vector<32x128xf32>
    %50 = tpu.matmul %47, %49, %cst_32 {dimension_numbers = #tpu.dot_dimension_numbers<[1], [0], [0], [1], [0, 0, 1, 1], [], []>} : vector<32x128xbf16>, vector<128x128xbf16>, vector<32x128xf32> -> vector<32x128xf32>
    %c7 = arith.constant 7 : index
    %c0_33 = arith.constant 0 : index
    %51 = vector.load %arg6[%c7, %c0_33] : memref<40x128xf32, #tpu.memory_space<vmem>>, vector<1x128xf32>
    %52 = vector.broadcast %51 : vector<1x128xf32> to vector<32x128xf32>
    %53 = arith.addf %50, %52 : vector<32x128xf32>
    %54 = arith.truncf %30 : vector<16x128xf32> to vector<16x128xbf16>
    %cst_34 = arith.constant dense<0.000000e+00> : vector<32x128xf32>
    %55 = tpu.matmul %0, %54, %cst_34 {dimension_numbers = #tpu.dot_dimension_numbers<[1], [0], [0], [1], [0, 0, 1, 1], [], []>} : vector<32x16xbf16>, vector<16x128xbf16>, vector<32x128xf32> -> vector<32x128xf32>
    %56 = arith.addf %55, %53 : vector<32x128xf32>
    %cst_35 = arith.constant 0.000000e+00 : f32
    %57 = vector.broadcast %cst_35 : f32 to vector<32x128xf32>
    %58 = arith.maximumf %56, %57 : vector<32x128xf32>
    %cst_36 = arith.constant 1.000000e-07 : f32
    %59 = vector.broadcast %cst_36 : f32 to vector<32x128xf32>
    %60 = arith.addf %58, %59 : vector<32x128xf32>
    %cst_37 = arith.constant dense<0xFF800000> : vector<128xf32>
    %61 = vector.multi_reduction <maximumf>, %60, %cst_37 [0] : vector<32x128xf32> to vector<128xf32>
    %62 = vector.shape_cast %61 : vector<128xf32> to vector<1x128xf32>
    %63 = vector.broadcast %62 : vector<1x128xf32> to vector<32x128xf32>
    %64 = arith.subf %60, %63 : vector<32x128xf32>
    %65 = math.exp %64 : vector<32x128xf32>
    %66 = arith.mulf %65, %60 : vector<32x128xf32>
    %cst_38 = arith.constant 0.000000e+00 : f32
    %67 = vector.broadcast %cst_38 : f32 to vector<32x128xf32>
    %68 = arith.select %4, %66, %67 : vector<32x128xi1>, vector<32x128xf32>
    %cst_39 = arith.constant 0.000000e+00 : f32
    %69 = vector.broadcast %cst_39 : f32 to vector<32x128xf32>
    %70 = arith.select %4, %65, %69 : vector<32x128xi1>, vector<32x128xf32>
    %c32_i32_40 = arith.constant 32 : i32
    %71 = tpu.dynamic_rotate %70 by %c32_i32_40 dim 1 : vector<32x128xf32>, i32 -> vector<32x128xf32>
    %72 = arith.addf %68, %71 : vector<32x128xf32>
    %73 = arith.truncf %72 : vector<32x128xf32> to vector<32x128xbf16>
    %cst_41 = arith.constant dense<0.000000e+00> : vector<16x128xf32>
    %74 = tpu.matmul %1, %73, %cst_41 {dimension_numbers = #tpu.dot_dimension_numbers<[1], [0], [0], [1], [0, 0, 1, 1], [], []>} : vector<16x32xbf16>, vector<32x128xbf16>, vector<16x128xf32> -> vector<16x128xf32>
    %c96_i32 = arith.constant 96 : i32
    %75 = tpu.dynamic_rotate %74 by %c96_i32 dim 1 : vector<16x128xf32>, i32 -> vector<16x128xf32>
    %cst_42 = arith.constant 1.000000e-16 : f32
    %76 = vector.broadcast %cst_42 : f32 to vector<16x128xf32>
    %77 = arith.addf %75, %76 : vector<16x128xf32>
    %78 = tpu.reciprocal %77 {approx = true} : vector<16x128xf32> -> vector<16x128xf32>
    %79 = arith.mulf %74, %78 : vector<16x128xf32>
    %cst_43 = arith.constant 0.000000e+00 : f32
    %80 = vector.broadcast %cst_43 : f32 to vector<16x128xf32>
    %81 = arith.select %7, %79, %80 : vector<16x128xi1>, vector<16x128xf32>
    %82 = arith.addf %81, %30 : vector<16x128xf32>
    %83 = arith.truncf %82 : vector<16x128xf32> to vector<16x128xbf16>
    %c4_44 = arith.constant 4 : index
    %c0_45 = arith.constant 0 : index
    %c0_46 = arith.constant 0 : index
    %84 = vector.load %arg5[%c4_44, %c0_45, %c0_46] : memref<13x128x128xbf16, #tpu.memory_space<vmem>>, vector<1x128x128xbf16>
    %85 = vector.shape_cast %84 : vector<1x128x128xbf16> to vector<128x128xbf16>
    %cst_47 = arith.constant dense<0.000000e+00> : vector<16x128xf32>
    %86 = tpu.matmul %83, %85, %cst_47 {dimension_numbers = #tpu.dot_dimension_numbers<[1], [0], [0], [1], [0, 0, 1, 1], [], []>} : vector<16x128xbf16>, vector<128x128xbf16>, vector<16x128xf32> -> vector<16x128xf32>
    %c10 = arith.constant 10 : index
    %c0_48 = arith.constant 0 : index
    %87 = vector.load %arg6[%c10, %c0_48] : memref<40x128xf32, #tpu.memory_space<vmem>>, vector<1x128xf32>
    %88 = vector.broadcast %87 : vector<1x128xf32> to vector<16x128xf32>
    %89 = arith.addf %86, %88 : vector<16x128xf32>
    %c11 = arith.constant 11 : index
    %c0_49 = arith.constant 0 : index
    %90 = vector.load %arg6[%c11, %c0_49] : memref<40x128xf32, #tpu.memory_space<vmem>>, vector<1x128xf32>
    %c12 = arith.constant 12 : index
    %c0_50 = arith.constant 0 : index
    %91 = vector.load %arg6[%c12, %c0_50] : memref<40x128xf32, #tpu.memory_space<vmem>>, vector<1x128xf32>
    %cst_51 = arith.constant dense<0.000000e+00> : vector<16xf32>
    %92 = vector.multi_reduction <add>, %89, %cst_51 [1] : vector<16x128xf32> to vector<16xf32>
    %93 = vector.shape_cast %92 : vector<16xf32> to vector<16x1xf32>
    %cst_52 = arith.constant 1.562500e-02 : f32
    %94 = vector.broadcast %cst_52 : f32 to vector<16x1xf32>
    %95 = arith.mulf %93, %94 : vector<16x1xf32>
    %96 = arith.mulf %89, %89 : vector<16x128xf32>
    %cst_53 = arith.constant dense<0.000000e+00> : vector<16xf32>
    %97 = vector.multi_reduction <add>, %96, %cst_53 [1] : vector<16x128xf32> to vector<16xf32>
    %98 = vector.shape_cast %97 : vector<16xf32> to vector<16x1xf32>
    %cst_54 = arith.constant 1.562500e-02 : f32
    %99 = vector.broadcast %cst_54 : f32 to vector<16x1xf32>
    %100 = arith.mulf %98, %99 : vector<16x1xf32>
    %101 = arith.mulf %95, %95 : vector<16x1xf32>
    %102 = arith.subf %100, %101 : vector<16x1xf32>
    %103 = vector.broadcast %95 : vector<16x1xf32> to vector<16x128xf32>
    %104 = arith.subf %89, %103 : vector<16x128xf32>
    %cst_55 = arith.constant 9.99999974E-6 : f32
    %105 = vector.broadcast %cst_55 : f32 to vector<16x1xf32>
    %106 = arith.addf %102, %105 : vector<16x1xf32>
    %107 = math.rsqrt %106 : vector<16x1xf32>
    %108 = vector.broadcast %107 : vector<16x1xf32> to vector<16x128xf32>
    %109 = arith.mulf %104, %108 : vector<16x128xf32>
    %110 = vector.broadcast %90 : vector<1x128xf32> to vector<16x128xf32>
    %111 = arith.mulf %109, %110 : vector<16x128xf32>
    %112 = vector.broadcast %91 : vector<1x128xf32> to vector<16x128xf32>
    %113 = arith.addf %111, %112 : vector<16x128xf32>
    %cst_56 = arith.constant 0.000000e+00 : f32
    %114 = vector.broadcast %cst_56 : f32 to vector<16x128xf32>
    %115 = arith.maximumf %113, %114 : vector<16x128xf32>
    %116 = arith.truncf %115 : vector<16x128xf32> to vector<16x128xbf16>
    %c5_57 = arith.constant 5 : index
    %c0_58 = arith.constant 0 : index
    %c0_59 = arith.constant 0 : index
    %117 = vector.load %arg5[%c5_57, %c0_58, %c0_59] : memref<13x128x128xbf16, #tpu.memory_space<vmem>>, vector<1x128x128xbf16>
    %118 = vector.shape_cast %117 : vector<1x128x128xbf16> to vector<128x128xbf16>
    %cst_60 = arith.constant dense<0.000000e+00> : vector<16x128xf32>
    %119 = tpu.matmul %116, %118, %cst_60 {dimension_numbers = #tpu.dot_dimension_numbers<[1], [0], [0], [1], [0, 0, 1, 1], [], []>} : vector<16x128xbf16>, vector<128x128xbf16>, vector<16x128xf32> -> vector<16x128xf32>
    %c13 = arith.constant 13 : index
    %c0_61 = arith.constant 0 : index
    %120 = vector.load %arg6[%c13, %c0_61] : memref<40x128xf32, #tpu.memory_space<vmem>>, vector<1x128xf32>
    %121 = vector.broadcast %120 : vector<1x128xf32> to vector<16x128xf32>
    %122 = arith.addf %119, %121 : vector<16x128xf32>
    %c14 = arith.constant 14 : index
    %c0_62 = arith.constant 0 : index
    %123 = vector.load %arg6[%c14, %c0_62] : memref<40x128xf32, #tpu.memory_space<vmem>>, vector<1x128xf32>
    %c15 = arith.constant 15 : index
    %c0_63 = arith.constant 0 : index
    %124 = vector.load %arg6[%c15, %c0_63] : memref<40x128xf32, #tpu.memory_space<vmem>>, vector<1x128xf32>
    %cst_64 = arith.constant dense<0.000000e+00> : vector<16xf32>
    %125 = vector.multi_reduction <add>, %122, %cst_64 [1] : vector<16x128xf32> to vector<16xf32>
    %126 = vector.shape_cast %125 : vector<16xf32> to vector<16x1xf32>
    %cst_65 = arith.constant 3.125000e-02 : f32
    %127 = vector.broadcast %cst_65 : f32 to vector<16x1xf32>
    %128 = arith.mulf %126, %127 : vector<16x1xf32>
    %129 = arith.mulf %122, %122 : vector<16x128xf32>
    %cst_66 = arith.constant dense<0.000000e+00> : vector<16xf32>
    %130 = vector.multi_reduction <add>, %129, %cst_66 [1] : vector<16x128xf32> to vector<16xf32>
    %131 = vector.shape_cast %130 : vector<16xf32> to vector<16x1xf32>
    %cst_67 = arith.constant 3.125000e-02 : f32
    %132 = vector.broadcast %cst_67 : f32 to vector<16x1xf32>
    %133 = arith.mulf %131, %132 : vector<16x1xf32>
    %134 = arith.mulf %128, %128 : vector<16x1xf32>
    %135 = arith.subf %133, %134 : vector<16x1xf32>
    %136 = vector.broadcast %128 : vector<16x1xf32> to vector<16x128xf32>
    %137 = arith.subf %122, %136 : vector<16x128xf32>
    %cst_68 = arith.constant 9.99999974E-6 : f32
    %138 = vector.broadcast %cst_68 : f32 to vector<16x1xf32>
    %139 = arith.addf %135, %138 : vector<16x1xf32>
    %140 = math.rsqrt %139 : vector<16x1xf32>
    %141 = vector.broadcast %140 : vector<16x1xf32> to vector<16x128xf32>
    %142 = arith.mulf %137, %141 : vector<16x128xf32>
    %143 = vector.broadcast %123 : vector<1x128xf32> to vector<16x128xf32>
    %144 = arith.mulf %142, %143 : vector<16x128xf32>
    %145 = vector.broadcast %124 : vector<1x128xf32> to vector<16x128xf32>
    %146 = arith.addf %144, %145 : vector<16x128xf32>
    %cst_69 = arith.constant 0.000000e+00 : f32
    %147 = vector.broadcast %cst_69 : f32 to vector<16x128xf32>
    %148 = arith.maximumf %146, %147 : vector<16x128xf32>
    %149 = arith.truncf %148 : vector<16x128xf32> to vector<16x128xbf16>
    %cst_70 = arith.constant dense<0.000000e+00> : vector<32x128xf32>
    %150 = tpu.matmul %0, %149, %cst_70 {dimension_numbers = #tpu.dot_dimension_numbers<[1], [0], [0], [1], [0, 0, 1, 1], [], []>} : vector<32x16xbf16>, vector<16x128xbf16>, vector<32x128xf32> -> vector<32x128xf32>
    %151 = arith.addf %150, %53 : vector<32x128xf32>
    %cst_71 = arith.constant 0.000000e+00 : f32
    %152 = vector.broadcast %cst_71 : f32 to vector<32x128xf32>
    %153 = arith.maximumf %151, %152 : vector<32x128xf32>
    %cst_72 = arith.constant 1.000000e-07 : f32
    %154 = vector.broadcast %cst_72 : f32 to vector<32x128xf32>
    %155 = arith.addf %153, %154 : vector<32x128xf32>
    %cst_73 = arith.constant dense<0xFF800000> : vector<128xf32>
    %156 = vector.multi_reduction <maximumf>, %155, %cst_73 [0] : vector<32x128xf32> to vector<128xf32>
    %157 = vector.shape_cast %156 : vector<128xf32> to vector<1x128xf32>
    %158 = vector.broadcast %157 : vector<1x128xf32> to vector<32x128xf32>
    %159 = arith.subf %155, %158 : vector<32x128xf32>
    %160 = math.exp %159 : vector<32x128xf32>
    %161 = arith.mulf %160, %155 : vector<32x128xf32>
    %cst_74 = arith.constant 0.000000e+00 : f32
    %162 = vector.broadcast %cst_74 : f32 to vector<32x128xf32>
    %163 = arith.select %4, %161, %162 : vector<32x128xi1>, vector<32x128xf32>
    %cst_75 = arith.constant 0.000000e+00 : f32
    %164 = vector.broadcast %cst_75 : f32 to vector<32x128xf32>
    %165 = arith.select %4, %160, %164 : vector<32x128xi1>, vector<32x128xf32>
    %c32_i32_76 = arith.constant 32 : i32
    %166 = tpu.dynamic_rotate %165 by %c32_i32_76 dim 1 : vector<32x128xf32>, i32 -> vector<32x128xf32>
    %167 = arith.addf %163, %166 : vector<32x128xf32>
    %168 = arith.truncf %167 : vector<32x128xf32> to vector<32x128xbf16>
    %cst_77 = arith.constant dense<0.000000e+00> : vector<16x128xf32>
    %169 = tpu.matmul %1, %168, %cst_77 {dimension_numbers = #tpu.dot_dimension_numbers<[1], [0], [0], [1], [0, 0, 1, 1], [], []>} : vector<16x32xbf16>, vector<32x128xbf16>, vector<16x128xf32> -> vector<16x128xf32>
    %c96_i32_78 = arith.constant 96 : i32
    %170 = tpu.dynamic_rotate %169 by %c96_i32_78 dim 1 : vector<16x128xf32>, i32 -> vector<16x128xf32>
    %cst_79 = arith.constant 1.000000e-16 : f32
    %171 = vector.broadcast %cst_79 : f32 to vector<16x128xf32>
    %172 = arith.addf %170, %171 : vector<16x128xf32>
    %173 = tpu.reciprocal %172 {approx = true} : vector<16x128xf32> -> vector<16x128xf32>
    %174 = arith.mulf %169, %173 : vector<16x128xf32>
    %cst_80 = arith.constant 0.000000e+00 : f32
    %175 = vector.broadcast %cst_80 : f32 to vector<16x128xf32>
    %176 = arith.select %7, %174, %175 : vector<16x128xi1>, vector<16x128xf32>
    %177 = arith.addf %176, %148 : vector<16x128xf32>
    %178 = arith.truncf %177 : vector<16x128xf32> to vector<16x128xbf16>
    %c6_81 = arith.constant 6 : index
    %c0_82 = arith.constant 0 : index
    %c0_83 = arith.constant 0 : index
    %179 = vector.load %arg5[%c6_81, %c0_82, %c0_83] : memref<13x128x128xbf16, #tpu.memory_space<vmem>>, vector<1x128x128xbf16>
    %180 = vector.shape_cast %179 : vector<1x128x128xbf16> to vector<128x128xbf16>
    %cst_84 = arith.constant dense<0.000000e+00> : vector<16x128xf32>
    %181 = tpu.matmul %178, %180, %cst_84 {dimension_numbers = #tpu.dot_dimension_numbers<[1], [0], [0], [1], [0, 0, 1, 1], [], []>} : vector<16x128xbf16>, vector<128x128xbf16>, vector<16x128xf32> -> vector<16x128xf32>
    %c16 = arith.constant 16 : index
    %c0_85 = arith.constant 0 : index
    %182 = vector.load %arg6[%c16, %c0_85] : memref<40x128xf32, #tpu.memory_space<vmem>>, vector<1x128xf32>
    %183 = vector.broadcast %182 : vector<1x128xf32> to vector<16x128xf32>
    %184 = arith.addf %181, %183 : vector<16x128xf32>
    %c17 = arith.constant 17 : index
    %c0_86 = arith.constant 0 : index
    %185 = vector.load %arg6[%c17, %c0_86] : memref<40x128xf32, #tpu.memory_space<vmem>>, vector<1x128xf32>
    %c18 = arith.constant 18 : index
    %c0_87 = arith.constant 0 : index
    %186 = vector.load %arg6[%c18, %c0_87] : memref<40x128xf32, #tpu.memory_space<vmem>>, vector<1x128xf32>
    %cst_88 = arith.constant dense<0.000000e+00> : vector<16xf32>
    %187 = vector.multi_reduction <add>, %184, %cst_88 [1] : vector<16x128xf32> to vector<16xf32>
    %188 = vector.shape_cast %187 : vector<16xf32> to vector<16x1xf32>
    %cst_89 = arith.constant 1.562500e-02 : f32
    %189 = vector.broadcast %cst_89 : f32 to vector<16x1xf32>
    %190 = arith.mulf %188, %189 : vector<16x1xf32>
    %191 = arith.mulf %184, %184 : vector<16x128xf32>
    %cst_90 = arith.constant dense<0.000000e+00> : vector<16xf32>
    %192 = vector.multi_reduction <add>, %191, %cst_90 [1] : vector<16x128xf32> to vector<16xf32>
    %193 = vector.shape_cast %192 : vector<16xf32> to vector<16x1xf32>
    %cst_91 = arith.constant 1.562500e-02 : f32
    %194 = vector.broadcast %cst_91 : f32 to vector<16x1xf32>
    %195 = arith.mulf %193, %194 : vector<16x1xf32>
    %196 = arith.mulf %190, %190 : vector<16x1xf32>
    %197 = arith.subf %195, %196 : vector<16x1xf32>
    %198 = vector.broadcast %190 : vector<16x1xf32> to vector<16x128xf32>
    %199 = arith.subf %184, %198 : vector<16x128xf32>
    %cst_92 = arith.constant 9.99999974E-6 : f32
    %200 = vector.broadcast %cst_92 : f32 to vector<16x1xf32>
    %201 = arith.addf %197, %200 : vector<16x1xf32>
    %202 = math.rsqrt %201 : vector<16x1xf32>
    %203 = vector.broadcast %202 : vector<16x1xf32> to vector<16x128xf32>
    %204 = arith.mulf %199, %203 : vector<16x128xf32>
    %205 = vector.broadcast %185 : vector<1x128xf32> to vector<16x128xf32>
    %206 = arith.mulf %204, %205 : vector<16x128xf32>
    %207 = vector.broadcast %186 : vector<1x128xf32> to vector<16x128xf32>
    %208 = arith.addf %206, %207 : vector<16x128xf32>
    %cst_93 = arith.constant 0.000000e+00 : f32
    %209 = vector.broadcast %cst_93 : f32 to vector<16x128xf32>
    %210 = arith.maximumf %208, %209 : vector<16x128xf32>
    %211 = arith.truncf %210 : vector<16x128xf32> to vector<16x128xbf16>
    %c7_94 = arith.constant 7 : index
    %c0_95 = arith.constant 0 : index
    %c0_96 = arith.constant 0 : index
    %212 = vector.load %arg5[%c7_94, %c0_95, %c0_96] : memref<13x128x128xbf16, #tpu.memory_space<vmem>>, vector<1x128x128xbf16>
    %213 = vector.shape_cast %212 : vector<1x128x128xbf16> to vector<128x128xbf16>
    %cst_97 = arith.constant dense<0.000000e+00> : vector<16x128xf32>
    %214 = tpu.matmul %211, %213, %cst_97 {dimension_numbers = #tpu.dot_dimension_numbers<[1], [0], [0], [1], [0, 0, 1, 1], [], []>} : vector<16x128xbf16>, vector<128x128xbf16>, vector<16x128xf32> -> vector<16x128xf32>
    %c19 = arith.constant 19 : index
    %c0_98 = arith.constant 0 : index
    %215 = vector.load %arg6[%c19, %c0_98] : memref<40x128xf32, #tpu.memory_space<vmem>>, vector<1x128xf32>
    %216 = vector.broadcast %215 : vector<1x128xf32> to vector<16x128xf32>
    %217 = arith.addf %214, %216 : vector<16x128xf32>
    %218 = arith.addf %122, %217 : vector<16x128xf32>
    %c20 = arith.constant 20 : index
    %c0_99 = arith.constant 0 : index
    %219 = vector.load %arg6[%c20, %c0_99] : memref<40x128xf32, #tpu.memory_space<vmem>>, vector<1x128xf32>
    %c21 = arith.constant 21 : index
    %c0_100 = arith.constant 0 : index
    %220 = vector.load %arg6[%c21, %c0_100] : memref<40x128xf32, #tpu.memory_space<vmem>>, vector<1x128xf32>
    %cst_101 = arith.constant dense<0.000000e+00> : vector<16xf32>
    %221 = vector.multi_reduction <add>, %218, %cst_101 [1] : vector<16x128xf32> to vector<16xf32>
    %222 = vector.shape_cast %221 : vector<16xf32> to vector<16x1xf32>
    %cst_102 = arith.constant 3.125000e-02 : f32
    %223 = vector.broadcast %cst_102 : f32 to vector<16x1xf32>
    %224 = arith.mulf %222, %223 : vector<16x1xf32>
    %225 = arith.mulf %218, %218 : vector<16x128xf32>
    %cst_103 = arith.constant dense<0.000000e+00> : vector<16xf32>
    %226 = vector.multi_reduction <add>, %225, %cst_103 [1] : vector<16x128xf32> to vector<16xf32>
    %227 = vector.shape_cast %226 : vector<16xf32> to vector<16x1xf32>
    %cst_104 = arith.constant 3.125000e-02 : f32
    %228 = vector.broadcast %cst_104 : f32 to vector<16x1xf32>
    %229 = arith.mulf %227, %228 : vector<16x1xf32>
    %230 = arith.mulf %224, %224 : vector<16x1xf32>
    %231 = arith.subf %229, %230 : vector<16x1xf32>
    %232 = vector.broadcast %224 : vector<16x1xf32> to vector<16x128xf32>
    %233 = arith.subf %218, %232 : vector<16x128xf32>
    %cst_105 = arith.constant 9.99999974E-6 : f32
    %234 = vector.broadcast %cst_105 : f32 to vector<16x1xf32>
    %235 = arith.addf %231, %234 : vector<16x1xf32>
    %236 = math.rsqrt %235 : vector<16x1xf32>
    %237 = vector.broadcast %236 : vector<16x1xf32> to vector<16x128xf32>
    %238 = arith.mulf %233, %237 : vector<16x128xf32>
    %239 = vector.broadcast %219 : vector<1x128xf32> to vector<16x128xf32>
    %240 = arith.mulf %238, %239 : vector<16x128xf32>
    %241 = vector.broadcast %220 : vector<1x128xf32> to vector<16x128xf32>
    %242 = arith.addf %240, %241 : vector<16x128xf32>
    %cst_106 = arith.constant 0.000000e+00 : f32
    %243 = vector.broadcast %cst_106 : f32 to vector<16x128xf32>
    %244 = arith.maximumf %242, %243 : vector<16x128xf32>
    %245 = arith.truncf %244 : vector<16x128xf32> to vector<16x128xbf16>
    %cst_107 = arith.constant dense<0.000000e+00> : vector<32x128xf32>
    %246 = tpu.matmul %0, %245, %cst_107 {dimension_numbers = #tpu.dot_dimension_numbers<[1], [0], [0], [1], [0, 0, 1, 1], [], []>} : vector<32x16xbf16>, vector<16x128xbf16>, vector<32x128xf32> -> vector<32x128xf32>
    %247 = arith.addf %246, %53 : vector<32x128xf32>
    %cst_108 = arith.constant 0.000000e+00 : f32
    %248 = vector.broadcast %cst_108 : f32 to vector<32x128xf32>
    %249 = arith.maximumf %247, %248 : vector<32x128xf32>
    %cst_109 = arith.constant 1.000000e-07 : f32
    %250 = vector.broadcast %cst_109 : f32 to vector<32x128xf32>
    %251 = arith.addf %249, %250 : vector<32x128xf32>
    %cst_110 = arith.constant dense<0xFF800000> : vector<128xf32>
    %252 = vector.multi_reduction <maximumf>, %251, %cst_110 [0] : vector<32x128xf32> to vector<128xf32>
    %253 = vector.shape_cast %252 : vector<128xf32> to vector<1x128xf32>
    %254 = vector.broadcast %253 : vector<1x128xf32> to vector<32x128xf32>
    %255 = arith.subf %251, %254 : vector<32x128xf32>
    %256 = math.exp %255 : vector<32x128xf32>
    %257 = arith.mulf %256, %251 : vector<32x128xf32>
    %cst_111 = arith.constant 0.000000e+00 : f32
    %258 = vector.broadcast %cst_111 : f32 to vector<32x128xf32>
    %259 = arith.select %4, %257, %258 : vector<32x128xi1>, vector<32x128xf32>
    %cst_112 = arith.constant 0.000000e+00 : f32
    %260 = vector.broadcast %cst_112 : f32 to vector<32x128xf32>
    %261 = arith.select %4, %256, %260 : vector<32x128xi1>, vector<32x128xf32>
    %c32_i32_113 = arith.constant 32 : i32
    %262 = tpu.dynamic_rotate %261 by %c32_i32_113 dim 1 : vector<32x128xf32>, i32 -> vector<32x128xf32>
    %263 = arith.addf %259, %262 : vector<32x128xf32>
    %264 = arith.truncf %263 : vector<32x128xf32> to vector<32x128xbf16>
    %cst_114 = arith.constant dense<0.000000e+00> : vector<16x128xf32>
    %265 = tpu.matmul %1, %264, %cst_114 {dimension_numbers = #tpu.dot_dimension_numbers<[1], [0], [0], [1], [0, 0, 1, 1], [], []>} : vector<16x32xbf16>, vector<32x128xbf16>, vector<16x128xf32> -> vector<16x128xf32>
    %c96_i32_115 = arith.constant 96 : i32
    %266 = tpu.dynamic_rotate %265 by %c96_i32_115 dim 1 : vector<16x128xf32>, i32 -> vector<16x128xf32>
    %cst_116 = arith.constant 1.000000e-16 : f32
    %267 = vector.broadcast %cst_116 : f32 to vector<16x128xf32>
    %268 = arith.addf %266, %267 : vector<16x128xf32>
    %269 = tpu.reciprocal %268 {approx = true} : vector<16x128xf32> -> vector<16x128xf32>
    %270 = arith.mulf %265, %269 : vector<16x128xf32>
    %cst_117 = arith.constant 0.000000e+00 : f32
    %271 = vector.broadcast %cst_117 : f32 to vector<16x128xf32>
    %272 = arith.select %7, %270, %271 : vector<16x128xi1>, vector<16x128xf32>
    %273 = arith.addf %272, %244 : vector<16x128xf32>
    %274 = arith.truncf %273 : vector<16x128xf32> to vector<16x128xbf16>
    %c8 = arith.constant 8 : index
    %c0_118 = arith.constant 0 : index
    %c0_119 = arith.constant 0 : index
    %275 = vector.load %arg5[%c8, %c0_118, %c0_119] : memref<13x128x128xbf16, #tpu.memory_space<vmem>>, vector<1x128x128xbf16>
    %276 = vector.shape_cast %275 : vector<1x128x128xbf16> to vector<128x128xbf16>
    %cst_120 = arith.constant dense<0.000000e+00> : vector<16x128xf32>
    %277 = tpu.matmul %274, %276, %cst_120 {dimension_numbers = #tpu.dot_dimension_numbers<[1], [0], [0], [1], [0, 0, 1, 1], [], []>} : vector<16x128xbf16>, vector<128x128xbf16>, vector<16x128xf32> -> vector<16x128xf32>
    %c22 = arith.constant 22 : index
    %c0_121 = arith.constant 0 : index
    %278 = vector.load %arg6[%c22, %c0_121] : memref<40x128xf32, #tpu.memory_space<vmem>>, vector<1x128xf32>
    %279 = vector.broadcast %278 : vector<1x128xf32> to vector<16x128xf32>
    %280 = arith.addf %277, %279 : vector<16x128xf32>
    %c23 = arith.constant 23 : index
    %c0_122 = arith.constant 0 : index
    %281 = vector.load %arg6[%c23, %c0_122] : memref<40x128xf32, #tpu.memory_space<vmem>>, vector<1x128xf32>
    %c24 = arith.constant 24 : index
    %c0_123 = arith.constant 0 : index
    %282 = vector.load %arg6[%c24, %c0_123] : memref<40x128xf32, #tpu.memory_space<vmem>>, vector<1x128xf32>
    %cst_124 = arith.constant dense<0.000000e+00> : vector<16xf32>
    %283 = vector.multi_reduction <add>, %280, %cst_124 [1] : vector<16x128xf32> to vector<16xf32>
    %284 = vector.shape_cast %283 : vector<16xf32> to vector<16x1xf32>
    %cst_125 = arith.constant 1.562500e-02 : f32
    %285 = vector.broadcast %cst_125 : f32 to vector<16x1xf32>
    %286 = arith.mulf %284, %285 : vector<16x1xf32>
    %287 = arith.mulf %280, %280 : vector<16x128xf32>
    %cst_126 = arith.constant dense<0.000000e+00> : vector<16xf32>
    %288 = vector.multi_reduction <add>, %287, %cst_126 [1] : vector<16x128xf32> to vector<16xf32>
    %289 = vector.shape_cast %288 : vector<16xf32> to vector<16x1xf32>
    %cst_127 = arith.constant 1.562500e-02 : f32
    %290 = vector.broadcast %cst_127 : f32 to vector<16x1xf32>
    %291 = arith.mulf %289, %290 : vector<16x1xf32>
    %292 = arith.mulf %286, %286 : vector<16x1xf32>
    %293 = arith.subf %291, %292 : vector<16x1xf32>
    %294 = vector.broadcast %286 : vector<16x1xf32> to vector<16x128xf32>
    %295 = arith.subf %280, %294 : vector<16x128xf32>
    %cst_128 = arith.constant 9.99999974E-6 : f32
    %296 = vector.broadcast %cst_128 : f32 to vector<16x1xf32>
    %297 = arith.addf %293, %296 : vector<16x1xf32>
    %298 = math.rsqrt %297 : vector<16x1xf32>
    %299 = vector.broadcast %298 : vector<16x1xf32> to vector<16x128xf32>
    %300 = arith.mulf %295, %299 : vector<16x128xf32>
    %301 = vector.broadcast %281 : vector<1x128xf32> to vector<16x128xf32>
    %302 = arith.mulf %300, %301 : vector<16x128xf32>
    %303 = vector.broadcast %282 : vector<1x128xf32> to vector<16x128xf32>
    %304 = arith.addf %302, %303 : vector<16x128xf32>
    %cst_129 = arith.constant 0.000000e+00 : f32
    %305 = vector.broadcast %cst_129 : f32 to vector<16x128xf32>
    %306 = arith.maximumf %304, %305 : vector<16x128xf32>
    %307 = arith.truncf %306 : vector<16x128xf32> to vector<16x128xbf16>
    %c9 = arith.constant 9 : index
    %c0_130 = arith.constant 0 : index
    %c0_131 = arith.constant 0 : index
    %308 = vector.load %arg5[%c9, %c0_130, %c0_131] : memref<13x128x128xbf16, #tpu.memory_space<vmem>>, vector<1x128x128xbf16>
    %309 = vector.shape_cast %308 : vector<1x128x128xbf16> to vector<128x128xbf16>
    %cst_132 = arith.constant dense<0.000000e+00> : vector<16x128xf32>
    %310 = tpu.matmul %307, %309, %cst_132 {dimension_numbers = #tpu.dot_dimension_numbers<[1], [0], [0], [1], [0, 0, 1, 1], [], []>} : vector<16x128xbf16>, vector<128x128xbf16>, vector<16x128xf32> -> vector<16x128xf32>
    %c25 = arith.constant 25 : index
    %c0_133 = arith.constant 0 : index
    %311 = vector.load %arg6[%c25, %c0_133] : memref<40x128xf32, #tpu.memory_space<vmem>>, vector<1x128xf32>
    %312 = vector.broadcast %311 : vector<1x128xf32> to vector<16x128xf32>
    %313 = arith.addf %310, %312 : vector<16x128xf32>
    %314 = arith.addf %218, %313 : vector<16x128xf32>
    %315 = arith.truncf %314 : vector<16x128xf32> to vector<16x128xbf16>
    %c10_134 = arith.constant 10 : index
    %c0_135 = arith.constant 0 : index
    %c0_136 = arith.constant 0 : index
    %316 = vector.load %arg5[%c10_134, %c0_135, %c0_136] : memref<13x128x128xbf16, #tpu.memory_space<vmem>>, vector<1x128x128xbf16>
    %317 = vector.shape_cast %316 : vector<1x128x128xbf16> to vector<128x128xbf16>
    %cst_137 = arith.constant dense<0.000000e+00> : vector<16x128xf32>
    %318 = tpu.matmul %315, %317, %cst_137 {dimension_numbers = #tpu.dot_dimension_numbers<[1], [0], [0], [1], [0, 0, 1, 1], [], []>} : vector<16x128xbf16>, vector<128x128xbf16>, vector<16x128xf32> -> vector<16x128xf32>
    %c26 = arith.constant 26 : index
    %c0_138 = arith.constant 0 : index
    %319 = vector.load %arg6[%c26, %c0_138] : memref<40x128xf32, #tpu.memory_space<vmem>>, vector<1x128xf32>
    %320 = vector.broadcast %319 : vector<1x128xf32> to vector<16x128xf32>
    %321 = arith.addf %318, %320 : vector<16x128xf32>
    %c27 = arith.constant 27 : index
    %c0_139 = arith.constant 0 : index
    %322 = vector.load %arg6[%c27, %c0_139] : memref<40x128xf32, #tpu.memory_space<vmem>>, vector<1x128xf32>
    %323 = vector.broadcast %322 : vector<1x128xf32> to vector<16x128xf32>
    %324 = arith.mulf %321, %323 : vector<16x128xf32>
    %c28 = arith.constant 28 : index
    %c0_140 = arith.constant 0 : index
    %325 = vector.load %arg6[%c28, %c0_140] : memref<40x128xf32, #tpu.memory_space<vmem>>, vector<1x128xf32>
    %326 = vector.broadcast %325 : vector<1x128xf32> to vector<16x128xf32>
    %327 = arith.addf %324, %326 : vector<16x128xf32>
    %cst_141 = arith.constant 0.000000e+00 : f32
    %328 = vector.broadcast %cst_141 : f32 to vector<16x128xf32>
    %329 = arith.maximumf %327, %328 : vector<16x128xf32>
    %330 = arith.truncf %329 : vector<16x128xf32> to vector<16x128xbf16>
    %c11_142 = arith.constant 11 : index
    %c0_143 = arith.constant 0 : index
    %c0_144 = arith.constant 0 : index
    %331 = vector.load %arg5[%c11_142, %c0_143, %c0_144] : memref<13x128x128xbf16, #tpu.memory_space<vmem>>, vector<1x128x128xbf16>
    %332 = vector.shape_cast %331 : vector<1x128x128xbf16> to vector<128x128xbf16>
    %cst_145 = arith.constant dense<0.000000e+00> : vector<16x128xf32>
    %333 = tpu.matmul %330, %332, %cst_145 {dimension_numbers = #tpu.dot_dimension_numbers<[1], [0], [0], [1], [0, 0, 1, 1], [], []>} : vector<16x128xbf16>, vector<128x128xbf16>, vector<16x128xf32> -> vector<16x128xf32>
    %c29 = arith.constant 29 : index
    %c0_146 = arith.constant 0 : index
    %334 = vector.load %arg6[%c29, %c0_146] : memref<40x128xf32, #tpu.memory_space<vmem>>, vector<1x128xf32>
    %335 = vector.broadcast %334 : vector<1x128xf32> to vector<16x128xf32>
    %336 = arith.addf %333, %335 : vector<16x128xf32>
    %c30 = arith.constant 30 : index
    %c0_147 = arith.constant 0 : index
    %337 = vector.load %arg6[%c30, %c0_147] : memref<40x128xf32, #tpu.memory_space<vmem>>, vector<1x128xf32>
    %338 = vector.broadcast %337 : vector<1x128xf32> to vector<16x128xf32>
    %339 = arith.mulf %336, %338 : vector<16x128xf32>
    %c31 = arith.constant 31 : index
    %c0_148 = arith.constant 0 : index
    %340 = vector.load %arg6[%c31, %c0_148] : memref<40x128xf32, #tpu.memory_space<vmem>>, vector<1x128xf32>
    %341 = vector.broadcast %340 : vector<1x128xf32> to vector<16x128xf32>
    %342 = arith.addf %339, %341 : vector<16x128xf32>
    %cst_149 = arith.constant 0.000000e+00 : f32
    %343 = vector.broadcast %cst_149 : f32 to vector<16x128xf32>
    %344 = arith.maximumf %342, %343 : vector<16x128xf32>
    %345 = arith.truncf %344 : vector<16x128xf32> to vector<16x128xbf16>
    %c12_150 = arith.constant 12 : index
    %c0_151 = arith.constant 0 : index
    %c0_152 = arith.constant 0 : index
    %346 = vector.load %arg5[%c12_150, %c0_151, %c0_152] : memref<13x128x128xbf16, #tpu.memory_space<vmem>>, vector<1x128x128xbf16>
    %347 = vector.shape_cast %346 : vector<1x128x128xbf16> to vector<128x128xbf16>
    %cst_153 = arith.constant dense<0.000000e+00> : vector<16x128xf32>
    %348 = tpu.matmul %345, %347, %cst_153 {dimension_numbers = #tpu.dot_dimension_numbers<[1], [0], [0], [1], [0, 0, 1, 1], [], []>} : vector<16x128xbf16>, vector<128x128xbf16>, vector<16x128xf32> -> vector<16x128xf32>
    %c32 = arith.constant 32 : index
    %c0_154 = arith.constant 0 : index
    %349 = vector.load %arg6[%c32, %c0_154] : memref<40x128xf32, #tpu.memory_space<vmem>>, vector<1x128xf32>
    %350 = vector.broadcast %349 : vector<1x128xf32> to vector<16x128xf32>
    %351 = arith.addf %348, %350 : vector<16x128xf32>
    %c0_155 = arith.constant 0 : index
    %c0_156 = arith.constant 0 : index
    %352 = vector.load %arg7[%c0_155, %c0_156] : memref<16x128xf32, #tpu.memory_space<vmem>>, vector<16x128xf32>
    tpu.vector_store %arg7[%c0_155, %c0_156], %351 {strides = array<i32>} : memref<16x128xf32, #tpu.memory_space<vmem>>, vector<16x128xf32>,
    return
  }
  func.func @transform_0(%arg0: i32) -> (i32, i32) {
    %c0_i32 = arith.constant 0 : i32
    %c0_i32_0 = arith.constant 0 : i32
    %c0_i32_1 = arith.constant 0 : i32
    return %c0_i32, %c0_i32_0 : i32, i32
  }
  func.func @transform_1(%arg0: i32) -> (i32, i32) {
    %c0_i32 = arith.constant 0 : i32
    %c0_i32_0 = arith.constant 0 : i32
    %c0_i32_1 = arith.constant 0 : i32
    return %c0_i32, %c0_i32_0 : i32, i32
  }
  func.func @transform_2(%arg0: i32) -> (i32, i32) {
    %c0_i32 = arith.constant 0 : i32
    %c0_i32_0 = arith.constant 0 : i32
    %c0_i32_1 = arith.constant 0 : i32
    return %c0_i32, %c0_i32_0 : i32, i32
  }
  func.func @transform_3(%arg0: i32) -> (i32, i32) {
    %c0_i32 = arith.constant 0 : i32
    %c0_i32_0 = arith.constant 0 : i32
    %c0_i32_1 = arith.constant 0 : i32
    return %c0_i32, %c0_i32_0 : i32, i32
  }
  func.func @transform_4(%arg0: i32) -> (i32, i32, i32) {
    %c0_i32 = arith.constant 0 : i32
    %c0_i32_0 = arith.constant 0 : i32
    %c0_i32_1 = arith.constant 0 : i32
    %c0_i32_2 = arith.constant 0 : i32
    return %c0_i32, %c0_i32_0, %c0_i32_1 : i32, i32, i32
  }
  func.func @transform_5(%arg0: i32) -> (i32, i32) {
    %c0_i32 = arith.constant 0 : i32
    %c0_i32_0 = arith.constant 0 : i32
    %c0_i32_1 = arith.constant 0 : i32
    return %c0_i32, %c0_i32_0 : i32, i32
  }
  func.func @transform_6(%arg0: i32) -> (i32, i32) {
    %c0_i32 = arith.constant 0 : i32
    %c0_i32_0 = arith.constant 0 : i32
    %c0_i32_1 = arith.constant 0 : i32
    return %c0_i32, %c0_i32_0 : i32, i32
  }
}

</mosaic_0001>

<llo_original>
// kernel: tpu_custom_call.1
$region0: #{tpu_custom_call.1}
  #allocation0 [shape = 'u32[]', space=smem, size = 0x4, offset = 0x4, fixed_abs, tag = 'smem constant byte address 0x4 - core index']
  #allocation1 [shape = 'u32[144,128]{1,0:T(1,128)}', space=vmem, size = 0x12000, scoped, tag = 'internal scratch']
  %s0 = inlined_call_operand.hbm [shape: f32[16,128], index: 0, kind: input, shape index: {}]
  %s1 = inlined_call_operand.hbm [shape: f32[32,128], index: 1, kind: input, shape index: {}]
  %s2 = inlined_call_operand.vmem [shape: bf16[32,16], index: 2, kind: input, shape index: {}]
  %s3 = inlined_call_operand.hbm [shape: bf16[16,32], index: 3, kind: input, shape index: {}]
  %s4 = inlined_call_operand.hbm [shape: bf16[13,128,128], index: 4, kind: input, shape index: {}]
  %s5 = inlined_call_operand.vmem [shape: f32[40,128], index: 5, kind: input, shape index: {}]
  %s6 = inlined_call_operand.hbm [shape: f32[16,128], index: 6, kind: output, shape index: {}]
  %s7 = sld [smem:[#allocation0]]
  $region50: #{tpu_custom_call.1} parent=0
    _
  %s9 = ssub.s32 1, %s7
  %s10 = scalar_select 0, %s9, %s7
  $region1: #{tpu_custom_call.1} parent=0
    #allocation2 [shape = 'u8[8192]{0}', space=vmem, size = 0x2000, scoped, tag = 'input window, operand 0, single buffered']
    #allocation3 [shape = 's32[1]{0}', space=sflag, size = 0x4, scoped, tag = 'scoped memory for tpu_custom_call.1']
    #allocation4 [shape = 's32[1]{0}', space=sflag, size = 0x4, scoped, tag = 'scoped memory for tpu_custom_call.1']
    #allocation5 [shape = 'u8[16384]{0}', space=vmem, size = 0x4000, scoped, tag = 'input window, operand 1, single buffered']
    #allocation6 [shape = 's32[1]{0}', space=sflag, size = 0x4, scoped, tag = 'scoped memory for tpu_custom_call.1']
    #allocation7 [shape = 'u8[4096]{0}', space=vmem, size = 0x1000, scoped, tag = 'input window, operand 3, single buffered']
    #allocation8 [shape = 'u8[425984]{0}', space=vmem, size = 0x68000, scoped, tag = 'input window, operand 4, single buffered']
    #allocation9 [shape = 's32[1]{0}', space=sflag, size = 0x4, scoped, tag = 'scoped memory for tpu_custom_call.1']
    #allocation10 [shape = 'u8[8192]{0}', space=vmem, size = 0x2000, scoped, tag = 'output window, operand 0, single buffered']
    %11 = vsyncpa [#allocation3], 0
    %12 = vsyncpa [#allocation6], 0
    %13 = vsyncpa [#allocation9], 0
    %14 = vsyncpa [#allocation4], 0
    // Predicated region
    $region2: #{tpu_custom_call.1} parent=1 // pred_check
      _
    $region3: #{tpu_custom_call.1} parent=1 // pred_check_branch
      %16 = sbr.rel (0) target = $region5
    $region4: #{tpu_custom_call.1} parent=1 // pred_region
      %s18 = ssub.s32 256, 256
      %19 = vsyncadd [#allocation3], %s18
      %s20 = sshll.u32 [#allocation2], 4
      %s21 = int_to_ptr.vmem [resolvable:$true] %s20
      %26 = dma.hbm_to_vmem [thread:$0]  %s0, 256, %s21, [#allocation3], 128, 128, 8
    $region5: #{tpu_custom_call.1} parent=1 // pred_fallthru
      _
    // Predicated region
    $region6: #{tpu_custom_call.1} parent=1 // pred_check
      _
    $region7: #{tpu_custom_call.1} parent=1 // pred_check_branch
      %28 = sbr.rel (0) target = $region9
    $region8: #{tpu_custom_call.1} parent=1 // pred_region
      %s30 = ssub.s32 512, 512
      %31 = vsyncadd [#allocation6], %s30
      %s32 = sshll.u32 [#allocation5], 4
      %s33 = int_to_ptr.vmem [resolvable:$true] %s32
      %38 = dma.hbm_to_vmem [thread:$0]  %s1, 512, %s33, [#allocation6], 128, 128, 8
    $region9: #{tpu_custom_call.1} parent=1 // pred_fallthru
      _
    // Predicated region
    $region10: #{tpu_custom_call.1} parent=1 // pred_check
      _
    $region11: #{tpu_custom_call.1} parent=1 // pred_check_branch
      %40 = sbr.rel (0) target = $region13
    $region12: #{tpu_custom_call.1} parent=1 // pred_region
      _
    $region13: #{tpu_custom_call.1} parent=1 // pred_fallthru
      _
    // Predicated region
    $region14: #{tpu_custom_call.1} parent=1 // pred_check
      _
    $region15: #{tpu_custom_call.1} parent=1 // pred_check_branch
      %42 = sbr.rel (0) target = $region17
    $region16: #{tpu_custom_call.1} parent=1 // pred_region
      %s44 = ssub.s32 128, 128
      %45 = vsyncadd [#allocation6], %s44
      %s46 = sshll.u32 [#allocation7], 4
      %s47 = int_to_ptr.vmem [resolvable:$true] %s46
      %52 = dma.hbm_to_vmem [thread:$0]  %s3, 128, %s47, [#allocation6], 64, 64, 4
    $region17: #{tpu_custom_call.1} parent=1 // pred_fallthru
      _
    // Predicated region
    $region18: #{tpu_custom_call.1} parent=1 // pred_check
      _
    $region19: #{tpu_custom_call.1} parent=1 // pred_check_branch
      %54 = sbr.rel (0) target = $region21
    $region20: #{tpu_custom_call.1} parent=1 // pred_region
      %s56 = ssub.s32 13312, 13312
      %57 = vsyncadd [#allocation9], %s56
      %s58 = sshll.u32 [#allocation8], 4
      %s59 = int_to_ptr.vmem [resolvable:$true] %s58
      %64 = dma.hbm_to_vmem [thread:$0]  %s4, 13312, %s59, [#allocation9], 64, 64, 4
    $region21: #{tpu_custom_call.1} parent=1 // pred_fallthru
      _
    // Predicated region
    $region22: #{tpu_custom_call.1} parent=1 // pred_check
      _
    $region23: #{tpu_custom_call.1} parent=1 // pred_check_branch
      %66 = sbr.rel (0) target = $region25
    $region24: #{tpu_custom_call.1} parent=1 // pred_region
      _
    $region25: #{tpu_custom_call.1} parent=1 // pred_fallthru
      _
    // Predicated region
    $region26: #{tpu_custom_call.1} parent=1 // pred_check
      _
    $region27: #{tpu_custom_call.1} parent=1 // pred_check_branch
      %68 = sbr.rel (0) target = $region29
    $region28: #{tpu_custom_call.1} parent=1 // pred_region
      %69 = dma.done [#allocation3], 256
    $region29: #{tpu_custom_call.1} parent=1 // pred_fallthru
      _
    // Predicated region
    $region30: #{tpu_custom_call.1} parent=1 // pred_check
      _
    $region31: #{tpu_custom_call.1} parent=1 // pred_check_branch
      %71 = sbr.rel (0) target = $region33
    $region32: #{tpu_custom_call.1} parent=1 // pred_region
      %72 = dma.done [#allocation6], 512
    $region33: #{tpu_custom_call.1} parent=1 // pred_fallthru
      _
    // Predicated region
    $region34: #{tpu_custom_call.1} parent=1 // pred_check
      _
    $region35: #{tpu_custom_call.1} parent=1 // pred_check_branch
      %74 = sbr.rel (0) target = $region37
    $region36: #{tpu_custom_call.1} parent=1 // pred_region
      %75 = dma.done [#allocation6], 128
    $region37: #{tpu_custom_call.1} parent=1 // pred_fallthru
      _
    // Predicated region
    $region38: #{tpu_custom_call.1} parent=1 // pred_check
      _
    $region39: #{tpu_custom_call.1} parent=1 // pred_check_branch
      %77 = sbr.rel (0) target = $region41
    $region40: #{tpu_custom_call.1} parent=1 // pred_region
      %78 = dma.done [#allocation9], 13312
    $region41: #{tpu_custom_call.1} parent=1 // pred_fallthru
      _
    %v80 = vld [vmem:[%s2] sm:$0xf]
    %v81 = vld [vmem:[%s2 + $0x4] sm:$0xf]
    %v82 = vld [vmem:[%s2 + $0x8] sm:$0xf]
    %v83 = vld [vmem:[%s2 + $0xc] sm:$0xf]
    %v84 = vld [vmem:[#allocation7] sm:$0xf]
    %v85 = vld [vmem:[#allocation7 + $0x4] sm:$0xf]
    %v86 = vlaneseq
    %v87 = vand.u32 %v86, 127
    %vm88 = vcmp.lt.s32.totalorder %v87, 32
    %v89 = vld [vmem:[#allocation2] sm:$0xff]
    %v90 = vld [vmem:[#allocation2 + $0x8] sm:$0xff]
    %v91 = vpack.c.bf16 %v90, %v89
    %v92 = vld [vmem:[#allocation8] sm:$0xf]
    %v93 = vld [vmem:[#allocation8 + $0x4] sm:$0xf]
    %v94 = vld [vmem:[#allocation8 + $0x8] sm:$0xf]
    %v95 = vld [vmem:[#allocation8 + $0xc] sm:$0xf]
    %v96 = vld [vmem:[#allocation8 + $0x10] sm:$0xf]
    %v97 = vld [vmem:[#allocation8 + $0x14] sm:$0xf]
    %v98 = vld [vmem:[#allocation8 + $0x18] sm:$0xf]
    %v99 = vld [vmem:[#allocation8 + $0x1c] sm:$0xf]
    %v100 = vld [vmem:[#allocation8 + $0x20] sm:$0xf]
    %v101 = vld [vmem:[#allocation8 + $0x24] sm:$0xf]
    %v102 = vld [vmem:[#allocation8 + $0x28] sm:$0xf]
    %v103 = vld [vmem:[#allocation8 + $0x2c] sm:$0xf]
    %v104 = vld [vmem:[#allocation8 + $0x30] sm:$0xf]
    %v105 = vld [vmem:[#allocation8 + $0x34] sm:$0xf]
    %v106 = vld [vmem:[#allocation8 + $0x38] sm:$0xf]
    %v107 = vld [vmem:[#allocation8 + $0x3c] sm:$0xf]
    %v108 = vld [vmem:[%s5] sm:$0x1]
    %v109 = vlaneseq
    %v110 = vshrl.u32 %v109, 7
    %v111 = vsub.s32 0, %v110
    %v112 = vrot.slane %v108, %v111
    %v129 = vunpack.c.l.b16 %v92
    %v130 = vunpack.c.l.b16 %v93
    %v131 = vunpack.c.l.b16 %v94
    %v132 = vunpack.c.l.b16 %v95
    %v133 = vunpack.c.l.b16 %v96
    %v134 = vunpack.c.l.b16 %v97
    %v135 = vunpack.c.l.b16 %v98
    %v136 = vunpack.c.l.b16 %v99
    %v137 = vunpack.c.l.b16 %v100
    %v138 = vunpack.c.l.b16 %v101
    %v139 = vunpack.c.l.b16 %v102
    %v140 = vunpack.c.l.b16 %v103
    %v141 = vunpack.c.l.b16 %v104
    %v142 = vunpack.c.l.b16 %v105
    %v143 = vunpack.c.l.b16 %v106
    %v144 = vunpack.c.l.b16 %v107
    %v145 = vpack.c.b16 %v130, %v129
    %v146 = vpack.c.b16 %v132, %v131
    %v147 = vpack.c.b16 %v134, %v133
    %v148 = vpack.c.b16 %v136, %v135
    %v149 = vpack.c.b16 %v138, %v137
    %v150 = vpack.c.b16 %v140, %v139
    %v151 = vpack.c.b16 %v142, %v141
    %v152 = vpack.c.b16 %v144, %v143
    %161 = vmatprep.subr.bf16.mxu0 0
    %162 = vmatpush1.bf16.msra.mxu0 %v145
    %163 = vmatprep.subr.bf16.mxu0 0
    %164 = vmatpush1.bf16.msra.mxu0 %v146
    %165 = vmatprep.subr.bf16.mxu0 0
    %166 = vmatpush1.bf16.msra.mxu0 %v147
    %167 = vmatprep.subr.bf16.mxu0 0
    %168 = vmatpush1.bf16.msra.mxu0 %v148
    %169 = vmatprep.subr.bf16.mxu0 0
    %170 = vmatpush1.bf16.msra.mxu0 %v149
    %171 = vmatprep.subr.bf16.mxu0 0
    %172 = vmatpush1.bf16.msra.mxu0 %v150
    %173 = vmatprep.subr.bf16.mxu0 0
    %174 = vmatpush1.bf16.msra.mxu0 %v151
    %175 = vmatprep.subr.bf16.mxu0 0
    %176 = vmatpush1.bf16.msra.mxu0 %v152
    %177 = vmatprep.subr.bf16.mxu0 0
    %178 = vmatpush1.bf16.msra.mxu0 0
    %179 = vmatprep.subr.bf16.mxu0 0
    %180 = vmatpush1.bf16.msra.mxu0 0
    %181 = vmatprep.subr.bf16.mxu0 0
    %182 = vmatpush1.bf16.msra.mxu0 0
    %183 = vmatprep.subr.bf16.mxu0 0
    %184 = vmatpush1.bf16.msra.mxu0 0
    %185 = vmatprep.subr.bf16.mxu0 0
    %186 = vmatpush1.bf16.msra.mxu0 0
    %187 = vmatprep.subr.bf16.mxu0 0
    %188 = vmatpush1.bf16.msra.mxu0 0
    %189 = vmatprep.subr.bf16.mxu0 0
    %190 = vmatpush1.bf16.msra.mxu0 0
    %191 = vmatprep.subr.bf16.mxu0 0
    %192 = vmatpush1.bf16.msra.mxu0 0
    %193 = vmatprep.mubr.bf16.mxu0 0
    %194 = vmatmul.mubr.bf16.gmra.mrb[0].mxu0 %v91
    %v195 = vpop.f32.mrb[0].mxu0
    %v196 = vadd.f32 %v112, %v195
    %v197 = vpop.f32.mrb[0].mxu0
    %v198 = vpop.f32.mrb[0].mxu0
    %v199 = vadd.f32 %v112, %v198
    %v200 = vpop.f32.mrb[0].mxu0
    %201 = vdwg.mxu0
    %v202 = vld [vmem:[%s5 + $0x1] sm:$0x1]
    %v203 = vlaneseq
    %v204 = vshrl.u32 %v203, 7
    %v205 = vsub.s32 0, %v204
    %v206 = vrot.slane %v202, %v205
    %v207 = vmul.f32 %v196, %v206
    %v208 = vmul.f32 %v199, %v206
    %v209 = vld [vmem:[%s5 + $0x2] sm:$0x1]
    %v210 = vlaneseq
    %v211 = vshrl.u32 %v210, 7
    %v212 = vsub.s32 0, %v211
    %v213 = vrot.slane %v209, %v212
    %v214 = vadd.f32 %v207, %v213
    %v215 = vadd.f32 %v208, %v213
    %v216 = vmax.f32 %v214, 0.0
    %v217 = vmax.f32 %v215, 0.0
    %v218 = vpack.c.bf16 %v217, %v216
    %s219 = scalar_lea.vmem [#allocation8], 64
    %v220 = vld [vmem:[%s219] sm:$0xf]
    %v221 = vld [vmem:[%s219 + $0x4] sm:$0xf]
    %v222 = vld [vmem:[%s219 + $0x8] sm:$0xf]
    %v223 = vld [vmem:[%s219 + $0xc] sm:$0xf]
    %v224 = vld [vmem:[%s219 + $0x10] sm:$0xf]
    %v225 = vld [vmem:[%s219 + $0x14] sm:$0xf]
    %v226 = vld [vmem:[%s219 + $0x18] sm:$0xf]
    %v227 = vld [vmem:[%s219 + $0x1c] sm:$0xf]
    %v228 = vld [vmem:[%s219 + $0x20] sm:$0xf]
    %v229 = vld [vmem:[%s219 + $0x24] sm:$0xf]
    %v230 = vld [vmem:[%s219 + $0x28] sm:$0xf]
    %v231 = vld [vmem:[%s219 + $0x2c] sm:$0xf]
    %v232 = vld [vmem:[%s219 + $0x30] sm:$0xf]
    %v233 = vld [vmem:[%s219 + $0x34] sm:$0xf]
    %v234 = vld [vmem:[%s219 + $0x38] sm:$0xf]
    %v235 = vld [vmem:[%s219 + $0x3c] sm:$0xf]
    %v236 = vld [vmem:[%s5 + $0x3] sm:$0x1]
    %v237 = vlaneseq
    %v238 = vshrl.u32 %v237, 7
    %v239 = vsub.s32 0, %v238
    %v240 = vrot.slane %v236, %v239
    %v257 = vunpack.c.l.b16 %v220
    %v258 = vunpack.c.l.b16 %v221
    %v259 = vunpack.c.l.b16 %v222
    %v260 = vunpack.c.l.b16 %v223
    %v261 = vunpack.c.l.b16 %v224
    %v262 = vunpack.c.l.b16 %v225
    %v263 = vunpack.c.l.b16 %v226
    %v264 = vunpack.c.l.b16 %v227
    %v265 = vunpack.c.l.b16 %v228
    %v266 = vunpack.c.l.b16 %v229
    %v267 = vunpack.c.l.b16 %v230
    %v268 = vunpack.c.l.b16 %v231
    %v269 = vunpack.c.l.b16 %v232
    %v270 = vunpack.c.l.b16 %v233
    %v271 = vunpack.c.l.b16 %v234
    %v272 = vunpack.c.l.b16 %v235
    %v273 = vpack.c.b16 %v258, %v257
    %v274 = vpack.c.b16 %v260, %v259
    %v275 = vpack.c.b16 %v262, %v261
    %v276 = vpack.c.b16 %v264, %v263
    %v277 = vpack.c.b16 %v266, %v265
    %v278 = vpack.c.b16 %v268, %v267
    %v279 = vpack.c.b16 %v270, %v269
    %v280 = vpack.c.b16 %v272, %v271
    %289 = vmatprep.subr.bf16.mxu0 0
    %290 = vmatpush1.bf16.msra.mxu0 %v273
    %291 = vmatprep.subr.bf16.mxu0 0
    %292 = vmatpush1.bf16.msra.mxu0 %v274
    %293 = vmatprep.subr.bf16.mxu0 0
    %294 = vmatpush1.bf16.msra.mxu0 %v275
    %295 = vmatprep.subr.bf16.mxu0 0
    %296 = vmatpush1.bf16.msra.mxu0 %v276
    %297 = vmatprep.subr.bf16.mxu0 0
    %298 = vmatpush1.bf16.msra.mxu0 %v277
    %299 = vmatprep.subr.bf16.mxu0 0
    %300 = vmatpush1.bf16.msra.mxu0 %v278
    %301 = vmatprep.subr.bf16.mxu0 0
    %302 = vmatpush1.bf16.msra.mxu0 %v279
    %303 = vmatprep.subr.bf16.mxu0 0
    %304 = vmatpush1.bf16.msra.mxu0 %v280
    %305 = vmatprep.subr.bf16.mxu0 0
    %306 = vmatpush1.bf16.msra.mxu0 0
    %307 = vmatprep.subr.bf16.mxu0 0
    %308 = vmatpush1.bf16.msra.mxu0 0
    %309 = vmatprep.subr.bf16.mxu0 0
    %310 = vmatpush1.bf16.msra.mxu0 0
    %311 = vmatprep.subr.bf16.mxu0 0
    %312 = vmatpush1.bf16.msra.mxu0 0
    %313 = vmatprep.subr.bf16.mxu0 0
    %314 = vmatpush1.bf16.msra.mxu0 0
    %315 = vmatprep.subr.bf16.mxu0 0
    %316 = vmatpush1.bf16.msra.mxu0 0
    %317 = vmatprep.subr.bf16.mxu0 0
    %318 = vmatpush1.bf16.msra.mxu0 0
    %319 = vmatprep.subr.bf16.mxu0 0
    %320 = vmatpush1.bf16.msra.mxu0 0
    %321 = vmatprep.mubr.bf16.mxu0 0
    %322 = vmatmul.mubr.bf16.gmra.mrb[0].mxu0 %v218
    %v323 = vpop.f32.mrb[0].mxu0
    %v324 = vadd.f32 %v240, %v323
    %v325 = vpop.f32.mrb[0].mxu0
    %v326 = vpop.f32.mrb[0].mxu0
    %v327 = vadd.f32 %v240, %v326
    %v328 = vpop.f32.mrb[0].mxu0
    %329 = vdwg.mxu0
    %v330 = vld [vmem:[#allocation5] sm:$0xff]
    %v331 = vld [vmem:[#allocation5 + $0x8] sm:$0xff]
    %v332 = vld [vmem:[#allocation5 + $0x10] sm:$0xff]
    %v333 = vld [vmem:[#allocation5 + $0x18] sm:$0xff]
    %v334 = vpack.c.bf16 %v331, %v330
    %v335 = vpack.c.bf16 %v333, %v332
    %s336 = scalar_lea.vmem [#allocation8], 128
    %v337 = vld [vmem:[%s336] sm:$0xf]
    %v338 = vld [vmem:[%s336 + $0x4] sm:$0xf]
    %v339 = vld [vmem:[%s336 + $0x8] sm:$0xf]
    %v340 = vld [vmem:[%s336 + $0xc] sm:$0xf]
    %v341 = vld [vmem:[%s336 + $0x10] sm:$0xf]
    %v342 = vld [vmem:[%s336 + $0x14] sm:$0xf]
    %v343 = vld [vmem:[%s336 + $0x18] sm:$0xf]
    %v344 = vld [vmem:[%s336 + $0x1c] sm:$0xf]
    %v345 = vld [vmem:[%s336 + $0x20] sm:$0xf]
    %v346 = vld [vmem:[%s336 + $0x24] sm:$0xf]
    %v347 = vld [vmem:[%s336 + $0x28] sm:$0xf]
    %v348 = vld [vmem:[%s336 + $0x2c] sm:$0xf]
    %v349 = vld [vmem:[%s336 + $0x30] sm:$0xf]
    %v350 = vld [vmem:[%s336 + $0x34] sm:$0xf]
    %v351 = vld [vmem:[%s336 + $0x38] sm:$0xf]
    %v352 = vld [vmem:[%s336 + $0x3c] sm:$0xf]
    %v353 = vld [vmem:[%s5 + $0x4] sm:$0x1]
    %v354 = vlaneseq
    %v355 = vshrl.u32 %v354, 7
    %v356 = vsub.s32 0, %v355
    %v357 = vrot.slane %v353, %v356
    %v374 = vunpack.c.l.b16 %v337
    %v375 = vunpack.c.l.b16 %v338
    %v376 = vunpack.c.l.b16 %v339
    %v377 = vunpack.c.l.b16 %v340
    %v378 = vunpack.c.l.b16 %v341
    %v379 = vunpack.c.l.b16 %v342
    %v380 = vunpack.c.l.b16 %v343
    %v381 = vunpack.c.l.b16 %v344
    %v382 = vunpack.c.l.b16 %v345
    %v383 = vunpack.c.l.b16 %v346
    %v384 = vunpack.c.l.b16 %v347
    %v385 = vunpack.c.l.b16 %v348
    %v386 = vunpack.c.l.b16 %v349
    %v387 = vunpack.c.l.b16 %v350
    %v388 = vunpack.c.l.b16 %v351
    %v389 = vunpack.c.l.b16 %v352
    %v390 = vpack.c.b16 %v375, %v374
    %v391 = vpack.c.b16 %v377, %v376
    %v392 = vpack.c.b16 %v379, %v378
    %v393 = vpack.c.b16 %v381, %v380
    %v394 = vpack.c.b16 %v383, %v382
    %v395 = vpack.c.b16 %v385, %v384
    %v396 = vpack.c.b16 %v387, %v386
    %v397 = vpack.c.b16 %v389, %v388
    %406 = vmatprep.subr.bf16.mxu0 0
    %407 = vmatpush1.bf16.msra.mxu0 %v390
    %408 = vmatprep.subr.bf16.mxu0 0
    %409 = vmatpush1.bf16.msra.mxu0 %v391
    %410 = vmatprep.subr.bf16.mxu0 0
    %411 = vmatpush1.bf16.msra.mxu0 %v392
    %412 = vmatprep.subr.bf16.mxu0 0
    %413 = vmatpush1.bf16.msra.mxu0 %v393
    %414 = vmatprep.subr.bf16.mxu0 0
    %415 = vmatpush1.bf16.msra.mxu0 %v394
    %416 = vmatprep.subr.bf16.mxu0 0
    %417 = vmatpush1.bf16.msra.mxu0 %v395
    %418 = vmatprep.subr.bf16.mxu0 0
    %419 = vmatpush1.bf16.msra.mxu0 %v396
    %420 = vmatprep.subr.bf16.mxu0 0
    %421 = vmatpush1.bf16.msra.mxu0 %v397
    %422 = vmatprep.subr.bf16.mxu0 0
    %423 = vmatpush1.bf16.msra.mxu0 0
    %424 = vmatprep.subr.bf16.mxu0 0
    %425 = vmatpush1.bf16.msra.mxu0 0
    %426 = vmatprep.subr.bf16.mxu0 0
    %427 = vmatpush1.bf16.msra.mxu0 0
    %428 = vmatprep.subr.bf16.mxu0 0
    %429 = vmatpush1.bf16.msra.mxu0 0
    %430 = vmatprep.subr.bf16.mxu0 0
    %431 = vmatpush1.bf16.msra.mxu0 0
    %432 = vmatprep.subr.bf16.mxu0 0
    %433 = vmatpush1.bf16.msra.mxu0 0
    %434 = vmatprep.subr.bf16.mxu0 0
    %435 = vmatpush1.bf16.msra.mxu0 0
    %436 = vmatprep.subr.bf16.mxu0 0
    %437 = vmatpush1.bf16.msra.mxu0 0
    %438 = vmatprep.mubr.bf16.mxu0 0
    %439 = vmatmul.mubr.bf16.gmra.mrb[0].mxu0 %v334
    %v440 = vpop.f32.mrb[0].mxu0
    %v441 = vadd.f32 %v357, %v440
    %v442 = vpop.f32.mrb[0].mxu0
    %v443 = vpop.f32.mrb[0].mxu0
    %v444 = vadd.f32 %v357, %v443
    %v445 = vpop.f32.mrb[0].mxu0
    %446 = vmatprep.mubr.bf16.mxu0 0
    %447 = vmatmul.mubr.bf16.gmra.mrb[0].mxu0 %v335
    %v448 = vpop.f32.mrb[0].mxu0
    %v449 = vadd.f32 %v357, %v448
    %v450 = vpop.f32.mrb[0].mxu0
    %v451 = vpop.f32.mrb[0].mxu0
    %v452 = vadd.f32 %v357, %v451
    %v453 = vpop.f32.mrb[0].mxu0
    %454 = vdwg.mxu0
    %v455 = vld [vmem:[%s5 + $0x5] sm:$0x1]
    %v456 = vlaneseq
    %v457 = vshrl.u32 %v456, 7
    %v458 = vsub.s32 0, %v457
    %v459 = vrot.slane %v455, %v458
    %v460 = vmul.f32 %v441, %v459
    %v461 = vmul.f32 %v444, %v459
    %v462 = vmul.f32 %v449, %v459
    %v463 = vmul.f32 %v452, %v459
    %v464 = vld [vmem:[%s5 + $0x6] sm:$0x1]
    %v465 = vlaneseq
    %v466 = vshrl.u32 %v465, 7
    %v467 = vsub.s32 0, %v466
    %v468 = vrot.slane %v464, %v467
    %v469 = vadd.f32 %v460, %v468
    %v470 = vadd.f32 %v461, %v468
    %v471 = vadd.f32 %v462, %v468
    %v472 = vadd.f32 %v463, %v468
    %v473 = vmax.f32 %v469, 0.0
    %v474 = vmax.f32 %v470, 0.0
    %v475 = vmax.f32 %v471, 0.0
    %v476 = vmax.f32 %v472, 0.0
    %v477 = vpack.c.bf16 %v474, %v473
    %v478 = vpack.c.bf16 %v476, %v475
    %s479 = scalar_lea.vmem [#allocation8], 192
    %v480 = vld [vmem:[%s479] sm:$0xf]
    %v481 = vld [vmem:[%s479 + $0x4] sm:$0xf]
    %v482 = vld [vmem:[%s479 + $0x8] sm:$0xf]
    %v483 = vld [vmem:[%s479 + $0xc] sm:$0xf]
    %v484 = vld [vmem:[%s479 + $0x10] sm:$0xf]
    %v485 = vld [vmem:[%s479 + $0x14] sm:$0xf]
    %v486 = vld [vmem:[%s479 + $0x18] sm:$0xf]
    %v487 = vld [vmem:[%s479 + $0x1c] sm:$0xf]
    %v488 = vld [vmem:[%s479 + $0x20] sm:$0xf]
    %v489 = vld [vmem:[%s479 + $0x24] sm:$0xf]
    %v490 = vld [vmem:[%s479 + $0x28] sm:$0xf]
    %v491 = vld [vmem:[%s479 + $0x2c] sm:$0xf]
    %v492 = vld [vmem:[%s479 + $0x30] sm:$0xf]
    %v493 = vld [vmem:[%s479 + $0x34] sm:$0xf]
    %v494 = vld [vmem:[%s479 + $0x38] sm:$0xf]
    %v495 = vld [vmem:[%s479 + $0x3c] sm:$0xf]
    %v496 = vld [vmem:[%s5 + $0x7] sm:$0x1]
    %v497 = vlaneseq
    %v498 = vshrl.u32 %v497, 7
    %v499 = vsub.s32 0, %v498
    %v500 = vrot.slane %v496, %v499
    %v517 = vunpack.c.l.b16 %v480
    %v518 = vunpack.c.l.b16 %v481
    %v519 = vunpack.c.l.b16 %v482
    %v520 = vunpack.c.l.b16 %v483
    %v521 = vunpack.c.l.b16 %v484
    %v522 = vunpack.c.l.b16 %v485
    %v523 = vunpack.c.l.b16 %v486
    %v524 = vunpack.c.l.b16 %v487
    %v525 = vunpack.c.l.b16 %v488
    %v526 = vunpack.c.l.b16 %v489
    %v527 = vunpack.c.l.b16 %v490
    %v528 = vunpack.c.l.b16 %v491
    %v529 = vunpack.c.l.b16 %v492
    %v530 = vunpack.c.l.b16 %v493
    %v531 = vunpack.c.l.b16 %v494
    %v532 = vunpack.c.l.b16 %v495
    %v533 = vpack.c.b16 %v518, %v517
    %v534 = vpack.c.b16 %v520, %v519
    %v535 = vpack.c.b16 %v522, %v521
    %v536 = vpack.c.b16 %v524, %v523
    %v537 = vpack.c.b16 %v526, %v525
    %v538 = vpack.c.b16 %v528, %v527
    %v539 = vpack.c.b16 %v530, %v529
    %v540 = vpack.c.b16 %v532, %v531
    %549 = vmatprep.subr.bf16.mxu0 0
    %550 = vmatpush1.bf16.msra.mxu0 %v533
    %551 = vmatprep.subr.bf16.mxu0 0
    %552 = vmatpush1.bf16.msra.mxu0 %v534
    %553 = vmatprep.subr.bf16.mxu0 0
    %554 = vmatpush1.bf16.msra.mxu0 %v535
    %555 = vmatprep.subr.bf16.mxu0 0
    %556 = vmatpush1.bf16.msra.mxu0 %v536
    %557 = vmatprep.subr.bf16.mxu0 0
    %558 = vmatpush1.bf16.msra.mxu0 %v537
    %559 = vmatprep.subr.bf16.mxu0 0
    %560 = vmatpush1.bf16.msra.mxu0 %v538
    %561 = vmatprep.subr.bf16.mxu0 0
    %562 = vmatpush1.bf16.msra.mxu0 %v539
    %563 = vmatprep.subr.bf16.mxu0 0
    %564 = vmatpush1.bf16.msra.mxu0 %v540
    %565 = vmatprep.subr.bf16.mxu0 0
    %566 = vmatpush1.bf16.msra.mxu0 0
    %567 = vmatprep.subr.bf16.mxu0 0
    %568 = vmatpush1.bf16.msra.mxu0 0
    %569 = vmatprep.subr.bf16.mxu0 0
    %570 = vmatpush1.bf16.msra.mxu0 0
    %571 = vmatprep.subr.bf16.mxu0 0
    %572 = vmatpush1.bf16.msra.mxu0 0
    %573 = vmatprep.subr.bf16.mxu0 0
    %574 = vmatpush1.bf16.msra.mxu0 0
    %575 = vmatprep.subr.bf16.mxu0 0
    %576 = vmatpush1.bf16.msra.mxu0 0
    %577 = vmatprep.subr.bf16.mxu0 0
    %578 = vmatpush1.bf16.msra.mxu0 0
    %579 = vmatprep.subr.bf16.mxu0 0
    %580 = vmatpush1.bf16.msra.mxu0 0
    %581 = vmatprep.mubr.bf16.mxu0 0
    %582 = vmatmul.mubr.bf16.gmra.mrb[0].mxu0 %v477
    %v583 = vpop.f32.mrb[0].mxu0
    %v584 = vadd.f32 %v500, %v583
    %v585 = vpop.f32.mrb[0].mxu0
    %v586 = vpop.f32.mrb[0].mxu0
    %v587 = vadd.f32 %v500, %v586
    %v588 = vpop.f32.mrb[0].mxu0
    %589 = vmatprep.mubr.bf16.mxu0 0
    %590 = vmatmul.mubr.bf16.gmra.mrb[0].mxu0 %v478
    %v591 = vpop.f32.mrb[0].mxu0
    %v592 = vadd.f32 %v500, %v591
    %v593 = vpop.f32.mrb[0].mxu0
    %v594 = vpop.f32.mrb[0].mxu0
    %v595 = vadd.f32 %v500, %v594
    %v596 = vpop.f32.mrb[0].mxu0
    %597 = vdwg.mxu0
    %v598 = vpack.c.bf16 %v327, %v324
    %v603 = vunpack.c.l.b16 %v80
    %v604 = vunpack.c.l.b16 %v81
    %v605 = vunpack.c.l.b16 %v82
    %v606 = vunpack.c.l.b16 %v83
    %v607 = vpack.c.b16 %v604, %v603
    %v608 = vpack.c.b16 %v606, %v605
    %vm609 = vcmask 130048
    %v611 = vsel %vm609, %v607, 0
    %v614 = vsel %vm609, %v608, 0
    %616 = vmatprep.subr.bf16.mxu0 0
    %617 = vmatpush1.bf16.msra.mxu0 %v598
    %618 = vmatprep.subr.bf16.mxu0 0
    %619 = vmatpush1.bf16.msra.mxu0 0
    %620 = vmatprep.subr.bf16.mxu0 0
    %621 = vmatpush1.bf16.msra.mxu0 0
    %622 = vmatprep.subr.bf16.mxu0 0
    %623 = vmatpush1.bf16.msra.mxu0 0
    %624 = vmatprep.subr.bf16.mxu0 0
    %625 = vmatpush1.bf16.msra.mxu0 0
    %626 = vmatprep.subr.bf16.mxu0 0
    %627 = vmatpush1.bf16.msra.mxu0 0
    %628 = vmatprep.subr.bf16.mxu0 0
    %629 = vmatpush1.bf16.msra.mxu0 0
    %630 = vmatprep.subr.bf16.mxu0 0
    %631 = vmatpush1.bf16.msra.mxu0 0
    %632 = vmatprep.subr.bf16.mxu0 0
    %633 = vmatpush1.bf16.msra.mxu0 0
    %634 = vmatprep.subr.bf16.mxu0 0
    %635 = vmatpush1.bf16.msra.mxu0 0
    %636 = vmatprep.subr.bf16.mxu0 0
    %637 = vmatpush1.bf16.msra.mxu0 0
    %638 = vmatprep.subr.bf16.mxu0 0
    %639 = vmatpush1.bf16.msra.mxu0 0
    %640 = vmatprep.subr.bf16.mxu0 0
    %641 = vmatpush1.bf16.msra.mxu0 0
    %642 = vmatprep.subr.bf16.mxu0 0
    %643 = vmatpush1.bf16.msra.mxu0 0
    %644 = vmatprep.subr.bf16.mxu0 0
    %645 = vmatpush1.bf16.msra.mxu0 0
    %646 = vmatprep.subr.bf16.mxu0 0
    %647 = vmatpush1.bf16.msra.mxu0 0
    %648 = vmatprep.mubr.bf16.mxu0 0
    %649 = vmatmul.mubr.bf16.gmra.mrb[0].mxu0 %v611
    %v650 = vpop.f32.mrb[0].mxu0
    %v651 = vadd.f32 %v584, %v650
    %v652 = vpop.f32.mrb[0].mxu0
    %v653 = vpop.f32.mrb[0].mxu0
    %v654 = vadd.f32 %v587, %v653
    %v655 = vpop.f32.mrb[0].mxu0
    %656 = vmatprep.mubr.bf16.mxu0 0
    %657 = vmatmul.mubr.bf16.gmra.mrb[0].mxu0 %v614
    %v658 = vpop.f32.mrb[0].mxu0
    %v659 = vadd.f32 %v592, %v658
    %v660 = vpop.f32.mrb[0].mxu0
    %v661 = vpop.f32.mrb[0].mxu0
    %v662 = vadd.f32 %v595, %v661
    %v663 = vpop.f32.mrb[0].mxu0
    %664 = vdwg.mxu0
    %v665 = vmax.f32 %v651, 0.0
    %v666 = vmax.f32 %v654, 0.0
    %v667 = vmax.f32 %v659, 0.0
    %v668 = vmax.f32 %v662, 0.0
    %v669 = vadd.f32 %v665, 1e-07
    %v670 = vadd.f32 %v666, 1e-07
    %v671 = vadd.f32 %v667, 1e-07
    %v672 = vadd.f32 %v668, 1e-07
    %v673 = vmax.f32 %v669, %v670
    %v674 = vmax.f32 %v671, %v672
    %v675 = vmax.f32 %v673, %v674
    %v676 = vrot.slane %v675, 4
    %v677 = vmax.f32 %v675, %v676
    %v678 = vrot.slane %v677, 2
    %v679 = vmax.f32 %v677, %v678
    %v680 = vrot.slane %v679, 1
    %v681 = vmax.f32 %v679, %v680
    %v682 = vsub.f32 %v669, %v681
    %v683 = vsub.f32 %v670, %v681
    %v684 = vsub.f32 %v671, %v681
    %v685 = vsub.f32 %v672, %v681
    %v686 = vmul.f32 %v682, 1.442695
    %v687 = vpow.pop %v686
    %v688 = vmul.f32 %v683, 1.442695
    %v689 = vpow.pop %v688
    %v690 = vmul.f32 %v684, 1.442695
    %v691 = vpow.pop %v690
    %v692 = vmul.f32 %v685, 1.442695
    %v693 = vpow.pop %v692
    %v694 = vmul.f32 %v687, %v669
    %v695 = vmul.f32 %v689, %v670
    %v696 = vmul.f32 %v691, %v671
    %v697 = vmul.f32 %v693, %v672
    %v698 = vsel %vm88, %v694, 0.0
    %v699 = vsel %vm88, %v695, 0.0
    %v700 = vsel %vm88, %v696, 0.0
    %v701 = vsel %vm88, %v697, 0.0
    %v702 = vsel %vm88, %v687, 0.0
    %v703 = vsel %vm88, %v689, 0.0
    %v704 = vsel %vm88, %v691, 0.0
    %v705 = vsel %vm88, %v693, 0.0
    %706 = vrot.lane.b32.xlu0 %v702, 32
    %v707 = vpop.permute.xlu0 %706
    %708 = vrot.lane.b32.xlu0 %v703, 32
    %v709 = vpop.permute.xlu0 %708
    %710 = vrot.lane.b32.xlu0 %v704, 32
    %v711 = vpop.permute.xlu0 %710
    %712 = vrot.lane.b32.xlu0 %v705, 32
    %v713 = vpop.permute.xlu0 %712
    %v714 = vadd.f32 %v698, %v707
    %v715 = vadd.f32 %v699, %v709
    %v716 = vadd.f32 %v700, %v711
    %v717 = vadd.f32 %v701, %v713
    %v718 = vpack.c.bf16 %v715, %v714
    %v719 = vpack.c.bf16 %v717, %v716
    %v722 = vunpack.c.l.b16 %v84
    %v723 = vunpack.c.l.b16 %v85
    %v724 = vpack.c.b16 %v723, %v722
    %vm725 = vcmask 261120
    %v727 = vsel %vm725, %v724, 0
    %729 = vmatprep.subr.bf16.mxu0 0
    %730 = vmatpush1.bf16.msra.mxu0 %v718
    %731 = vmatprep.subr.bf16.mxu0 0
    %732 = vmatpush1.bf16.msra.mxu0 %v719
    %733 = vmatprep.subr.bf16.mxu0 0
    %734 = vmatpush1.bf16.msra.mxu0 0
    %735 = vmatprep.subr.bf16.mxu0 0
    %736 = vmatpush1.bf16.msra.mxu0 0
    %737 = vmatprep.subr.bf16.mxu0 0
    %738 = vmatpush1.bf16.msra.mxu0 0
    %739 = vmatprep.subr.bf16.mxu0 0
    %740 = vmatpush1.bf16.msra.mxu0 0
    %741 = vmatprep.subr.bf16.mxu0 0
    %742 = vmatpush1.bf16.msra.mxu0 0
    %743 = vmatprep.subr.bf16.mxu0 0
    %744 = vmatpush1.bf16.msra.mxu0 0
    %745 = vmatprep.subr.bf16.mxu0 0
    %746 = vmatpush1.bf16.msra.mxu0 0
    %747 = vmatprep.subr.bf16.mxu0 0
    %748 = vmatpush1.bf16.msra.mxu0 0
    %749 = vmatprep.subr.bf16.mxu0 0
    %750 = vmatpush1.bf16.msra.mxu0 0
    %751 = vmatprep.subr.bf16.mxu0 0
    %752 = vmatpush1.bf16.msra.mxu0 0
    %753 = vmatprep.subr.bf16.mxu0 0
    %754 = vmatpush1.bf16.msra.mxu0 0
    %755 = vmatprep.subr.bf16.mxu0 0
    %756 = vmatpush1.bf16.msra.mxu0 0
    %757 = vmatprep.subr.bf16.mxu0 0
    %758 = vmatpush1.bf16.msra.mxu0 0
    %759 = vmatprep.subr.bf16.mxu0 0
    %760 = vmatpush1.bf16.msra.mxu0 0
    %761 = vmatprep.mubr.bf16.mxu0 0
    %762 = vmatmul.mubr.bf16.gmra.mrb[0].mxu0 %v727
    %v763 = vpop.f32.mrb[0].mxu0
    %v764 = vadd.f32 0.0, %v763
    %v765 = vpop.f32.mrb[0].mxu0
    %v766 = vpop.f32.mrb[0].mxu0
    %v767 = vadd.f32 0.0, %v766
    %v768 = vpop.f32.mrb[0].mxu0
    %769 = vdwg.mxu0
    %770 = vrot.lane.b32.xlu0 %v764, 96
    %v771 = vpop.permute.xlu0 %770
    %772 = vrot.lane.b32.xlu0 %v767, 96
    %v773 = vpop.permute.xlu0 %772
    %v774 = vadd.f32 %v771, 1e-16
    %v775 = vadd.f32 %v773, 1e-16
    %v776 = vrcp.pop %v774
    %v777 = vrcp.pop %v775
    %v778 = vmul.f32 %v764, %v776
    %v779 = vmul.f32 %v767, %v777
    %v780 = vsel %vm88, %v778, 0.0
    %v781 = vsel %vm88, %v779, 0.0
    %v782 = vadd.f32 %v780, %v324
    %v783 = vadd.f32 %v781, %v327
    %v784 = vpack.c.bf16 %v783, %v782
    %s785 = scalar_lea.vmem [#allocation8], 256
    %v786 = vld [vmem:[%s785] sm:$0xf]
    %v787 = vld [vmem:[%s785 + $0x4] sm:$0xf]
    %v788 = vld [vmem:[%s785 + $0x8] sm:$0xf]
    %v789 = vld [vmem:[%s785 + $0xc] sm:$0xf]
    %v790 = vld [vmem:[%s785 + $0x10] sm:$0xf]
    %v791 = vld [vmem:[%s785 + $0x14] sm:$0xf]
    %v792 = vld [vmem:[%s785 + $0x18] sm:$0xf]
    %v793 = vld [vmem:[%s785 + $0x1c] sm:$0xf]
    %v794 = vld [vmem:[%s785 + $0x20] sm:$0xf]
    %v795 = vld [vmem:[%s785 + $0x24] sm:$0xf]
    %v796 = vld [vmem:[%s785 + $0x28] sm:$0xf]
    %v797 = vld [vmem:[%s785 + $0x2c] sm:$0xf]
    %v798 = vld [vmem:[%s785 + $0x30] sm:$0xf]
    %v799 = vld [vmem:[%s785 + $0x34] sm:$0xf]
    %v800 = vld [vmem:[%s785 + $0x38] sm:$0xf]
    %v801 = vld [vmem:[%s785 + $0x3c] sm:$0xf]
    %v802 = vld [vmem:[%s5 + $0xa] sm:$0x1]
    %v803 = vlaneseq
    %v804 = vshrl.u32 %v803, 7
    %v805 = vsub.s32 0, %v804
    %v806 = vrot.slane %v802, %v805
    %v823 = vunpack.c.l.b16 %v786
    %v824 = vunpack.c.l.b16 %v787
    %v825 = vunpack.c.l.b16 %v788
    %v826 = vunpack.c.l.b16 %v789
    %v827 = vunpack.c.l.b16 %v790
    %v828 = vunpack.c.l.b16 %v791
    %v829 = vunpack.c.l.b16 %v792
    %v830 = vunpack.c.l.b16 %v793
    %v831 = vunpack.c.l.b16 %v794
    %v832 = vunpack.c.l.b16 %v795
    %v833 = vunpack.c.l.b16 %v796
    %v834 = vunpack.c.l.b16 %v797
    %v835 = vunpack.c.l.b16 %v798
    %v836 = vunpack.c.l.b16 %v799
    %v837 = vunpack.c.l.b16 %v800
    %v838 = vunpack.c.l.b16 %v801
    %v839 = vpack.c.b16 %v824, %v823
    %v840 = vpack.c.b16 %v826, %v825
    %v841 = vpack.c.b16 %v828, %v827
    %v842 = vpack.c.b16 %v830, %v829
    %v843 = vpack.c.b16 %v832, %v831
    %v844 = vpack.c.b16 %v834, %v833
    %v845 = vpack.c.b16 %v836, %v835
    %v846 = vpack.c.b16 %v838, %v837
    %855 = vmatprep.subr.bf16.mxu0 0
    %856 = vmatpush1.bf16.msra.mxu0 %v839
    %857 = vmatprep.subr.bf16.mxu0 0
    %858 = vmatpush1.bf16.msra.mxu0 %v840
    %859 = vmatprep.subr.bf16.mxu0 0
    %860 = vmatpush1.bf16.msra.mxu0 %v841
    %861 = vmatprep.subr.bf16.mxu0 0
    %862 = vmatpush1.bf16.msra.mxu0 %v842
    %863 = vmatprep.subr.bf16.mxu0 0
    %864 = vmatpush1.bf16.msra.mxu0 %v843
    %865 = vmatprep.subr.bf16.mxu0 0
    %866 = vmatpush1.bf16.msra.mxu0 %v844
    %867 = vmatprep.subr.bf16.mxu0 0
    %868 = vmatpush1.bf16.msra.mxu0 %v845
    %869 = vmatprep.subr.bf16.mxu0 0
    %870 = vmatpush1.bf16.msra.mxu0 %v846
    %871 = vmatprep.subr.bf16.mxu0 0
    %872 = vmatpush1.bf16.msra.mxu0 0
    %873 = vmatprep.subr.bf16.mxu0 0
    %874 = vmatpush1.bf16.msra.mxu0 0
    %875 = vmatprep.subr.bf16.mxu0 0
    %876 = vmatpush1.bf16.msra.mxu0 0
    %877 = vmatprep.subr.bf16.mxu0 0
    %878 = vmatpush1.bf16.msra.mxu0 0
    %879 = vmatprep.subr.bf16.mxu0 0
    %880 = vmatpush1.bf16.msra.mxu0 0
    %881 = vmatprep.subr.bf16.mxu0 0
    %882 = vmatpush1.bf16.msra.mxu0 0
    %883 = vmatprep.subr.bf16.mxu0 0
    %884 = vmatpush1.bf16.msra.mxu0 0
    %885 = vmatprep.subr.bf16.mxu0 0
    %886 = vmatpush1.bf16.msra.mxu0 0
    %887 = vmatprep.mubr.bf16.mxu0 0
    %888 = vmatmul.mubr.bf16.gmra.mrb[0].mxu0 %v784
    %v889 = vpop.f32.mrb[0].mxu0
    %v890 = vadd.f32 %v806, %v889
    %v891 = vpop.f32.mrb[0].mxu0
    %v892 = vpop.f32.mrb[0].mxu0
    %v893 = vadd.f32 %v806, %v892
    %v894 = vpop.f32.mrb[0].mxu0
    %895 = vdwg.mxu0
    %v896 = vld [vmem:[%s5 + $0xb] sm:$0x1]
    %v897 = vld [vmem:[%s5 + $0xc] sm:$0x1]
    %898 = vadd.xlane.f32.xlu0 %v890
    %v899 = vpop.xlane.xlu0 %898
    %900 = vadd.xlane.f32.xlu0 %v893
    %v901 = vpop.xlane.xlu0 %900
    %v902 = vmul.f32 %v899, 0.015625
    %v903 = vmul.f32 %v901, 0.015625
    %v904 = vmul.f32 %v890, %v890
    %v905 = vmul.f32 %v893, %v893
    %906 = vadd.xlane.f32.xlu0 %v904
    %v907 = vpop.xlane.xlu0 %906
    %908 = vadd.xlane.f32.xlu0 %v905
    %v909 = vpop.xlane.xlu0 %908
    %v910 = vmul.f32 %v907, 0.015625
    %v911 = vmul.f32 %v909, 0.015625
    %v912 = vmul.f32 %v902, %v902
    %v913 = vmul.f32 %v903, %v903
    %v914 = vsub.f32 %v910, %v912
    %v915 = vsub.f32 %v911, %v913
    %v916 = vsub.f32 %v890, %v902
    %v917 = vsub.f32 %v893, %v903
    %v918 = vadd.f32 %v914, 1e-05
    %v919 = vadd.f32 %v915, 1e-05
    %v920 = vrsqrt.pop %v918
    %v921 = vrsqrt.pop %v919
    %v922 = vmul.f32 %v916, %v920
    %v923 = vmul.f32 %v917, %v921
    %v924 = vlaneseq
    %v925 = vshrl.u32 %v924, 7
    %v926 = vsub.s32 0, %v925
    %v927 = vrot.slane %v896, %v926
    %v928 = vmul.f32 %v922, %v927
    %v929 = vmul.f32 %v923, %v927
    %v930 = vlaneseq
    %v931 = vshrl.u32 %v930, 7
    %v932 = vsub.s32 0, %v931
    %v933 = vrot.slane %v897, %v932
    %v934 = vadd.f32 %v928, %v933
    %v935 = vadd.f32 %v929, %v933
    %v936 = vmax.f32 %v934, 0.0
    %v937 = vmax.f32 %v935, 0.0
    %v938 = vpack.c.bf16 %v937, %v936
    %s939 = scalar_lea.vmem [#allocation8], 320
    %v940 = vld [vmem:[%s939] sm:$0xf]
    %v941 = vld [vmem:[%s939 + $0x4] sm:$0xf]
    %v942 = vld [vmem:[%s939 + $0x8] sm:$0xf]
    %v943 = vld [vmem:[%s939 + $0xc] sm:$0xf]
    %v944 = vld [vmem:[%s939 + $0x10] sm:$0xf]
    %v945 = vld [vmem:[%s939 + $0x14] sm:$0xf]
    %v946 = vld [vmem:[%s939 + $0x18] sm:$0xf]
    %v947 = vld [vmem:[%s939 + $0x1c] sm:$0xf]
    %v948 = vld [vmem:[%s939 + $0x20] sm:$0xf]
    %v949 = vld [vmem:[%s939 + $0x24] sm:$0xf]
    %v950 = vld [vmem:[%s939 + $0x28] sm:$0xf]
    %v951 = vld [vmem:[%s939 + $0x2c] sm:$0xf]
    %v952 = vld [vmem:[%s939 + $0x30] sm:$0xf]
    %v953 = vld [vmem:[%s939 + $0x34] sm:$0xf]
    %v954 = vld [vmem:[%s939 + $0x38] sm:$0xf]
    %v955 = vld [vmem:[%s939 + $0x3c] sm:$0xf]
    %v956 = vld [vmem:[%s5 + $0xd] sm:$0x1]
    %v957 = vlaneseq
    %v958 = vshrl.u32 %v957, 7
    %v959 = vsub.s32 0, %v958
    %v960 = vrot.slane %v956, %v959
    %v977 = vunpack.c.l.b16 %v940
    %v978 = vunpack.c.l.b16 %v941
    %v979 = vunpack.c.l.b16 %v942
    %v980 = vunpack.c.l.b16 %v943
    %v981 = vunpack.c.l.b16 %v944
    %v982 = vunpack.c.l.b16 %v945
    %v983 = vunpack.c.l.b16 %v946
    %v984 = vunpack.c.l.b16 %v947
    %v985 = vunpack.c.l.b16 %v948
    %v986 = vunpack.c.l.b16 %v949
    %v987 = vunpack.c.l.b16 %v950
    %v988 = vunpack.c.l.b16 %v951
    %v989 = vunpack.c.l.b16 %v952
    %v990 = vunpack.c.l.b16 %v953
    %v991 = vunpack.c.l.b16 %v954
    %v992 = vunpack.c.l.b16 %v955
    %v993 = vpack.c.b16 %v978, %v977
    %v994 = vpack.c.b16 %v980, %v979
    %v995 = vpack.c.b16 %v982, %v981
    %v996 = vpack.c.b16 %v984, %v983
    %v997 = vpack.c.b16 %v986, %v985
    %v998 = vpack.c.b16 %v988, %v987
    %v999 = vpack.c.b16 %v990, %v989
    %v1000 = vpack.c.b16 %v992, %v991
    %1009 = vmatprep.subr.bf16.mxu0 0
    %1010 = vmatpush1.bf16.msra.mxu0 %v993
    %1011 = vmatprep.subr.bf16.mxu0 0
    %1012 = vmatpush1.bf16.msra.mxu0 %v994
    %1013 = vmatprep.subr.bf16.mxu0 0
    %1014 = vmatpush1.bf16.msra.mxu0 %v995
    %1015 = vmatprep.subr.bf16.mxu0 0
    %1016 = vmatpush1.bf16.msra.mxu0 %v996
    %1017 = vmatprep.subr.bf16.mxu0 0
    %1018 = vmatpush1.bf16.msra.mxu0 %v997
    %1019 = vmatprep.subr.bf16.mxu0 0
    %1020 = vmatpush1.bf16.msra.mxu0 %v998
    %1021 = vmatprep.subr.bf16.mxu0 0
    %1022 = vmatpush1.bf16.msra.mxu0 %v999
    %1023 = vmatprep.subr.bf16.mxu0 0
    %1024 = vmatpush1.bf16.msra.mxu0 %v1000
    %1025 = vmatprep.subr.bf16.mxu0 0
    %1026 = vmatpush1.bf16.msra.mxu0 0
    %1027 = vmatprep.subr.bf16.mxu0 0
    %1028 = vmatpush1.bf16.msra.mxu0 0
    %1029 = vmatprep.subr.bf16.mxu0 0
    %1030 = vmatpush1.bf16.msra.mxu0 0
    %1031 = vmatprep.subr.bf16.mxu0 0
    %1032 = vmatpush1.bf16.msra.mxu0 0
    %1033 = vmatprep.subr.bf16.mxu0 0
    %1034 = vmatpush1.bf16.msra.mxu0 0
    %1035 = vmatprep.subr.bf16.mxu0 0
    %1036 = vmatpush1.bf16.msra.mxu0 0
    %1037 = vmatprep.subr.bf16.mxu0 0
    %1038 = vmatpush1.bf16.msra.mxu0 0
    %1039 = vmatprep.subr.bf16.mxu0 0
    %1040 = vmatpush1.bf16.msra.mxu0 0
    %1041 = vmatprep.mubr.bf16.mxu0 0
    %1042 = vmatmul.mubr.bf16.gmra.mrb[0].mxu0 %v938
    %v1043 = vpop.f32.mrb[0].mxu0
    %v1044 = vadd.f32 %v960, %v1043
    %v1045 = vpop.f32.mrb[0].mxu0
    %v1046 = vpop.f32.mrb[0].mxu0
    %v1047 = vadd.f32 %v960, %v1046
    %v1048 = vpop.f32.mrb[0].mxu0
    %1049 = vdwg.mxu0
    %v1050 = vld [vmem:[%s5 + $0xe] sm:$0x1]
    %v1051 = vld [vmem:[%s5 + $0xf] sm:$0x1]
    %1052 = vadd.xlane.f32.xlu0 %v1044
    %v1053 = vpop.xlane.xlu0 %1052
    %1054 = vadd.xlane.f32.xlu0 %v1047
    %v1055 = vpop.xlane.xlu0 %1054
    %v1056 = vmul.f32 %v1053, 0.03125
    %v1057 = vmul.f32 %v1055, 0.03125
    %v1058 = vmul.f32 %v1044, %v1044
    %v1059 = vmul.f32 %v1047, %v1047
    %1060 = vadd.xlane.f32.xlu0 %v1058
    %v1061 = vpop.xlane.xlu0 %1060
    %1062 = vadd.xlane.f32.xlu0 %v1059
    %v1063 = vpop.xlane.xlu0 %1062
    %v1064 = vmul.f32 %v1061, 0.03125
    %v1065 = vmul.f32 %v1063, 0.03125
    %v1066 = vmul.f32 %v1056, %v1056
    %v1067 = vmul.f32 %v1057, %v1057
    %v1068 = vsub.f32 %v1064, %v1066
    %v1069 = vsub.f32 %v1065, %v1067
    %v1070 = vsub.f32 %v1044, %v1056
    %v1071 = vsub.f32 %v1047, %v1057
    %v1072 = vadd.f32 %v1068, 1e-05
    %v1073 = vadd.f32 %v1069, 1e-05
    %v1074 = vrsqrt.pop %v1072
    %v1075 = vrsqrt.pop %v1073
    %v1076 = vmul.f32 %v1070, %v1074
    %v1077 = vmul.f32 %v1071, %v1075
    %v1078 = vlaneseq
    %v1079 = vshrl.u32 %v1078, 7
    %v1080 = vsub.s32 0, %v1079
    %v1081 = vrot.slane %v1050, %v1080
    %v1082 = vmul.f32 %v1076, %v1081
    %v1083 = vmul.f32 %v1077, %v1081
    %v1084 = vlaneseq
    %v1085 = vshrl.u32 %v1084, 7
    %v1086 = vsub.s32 0, %v1085
    %v1087 = vrot.slane %v1051, %v1086
    %v1088 = vadd.f32 %v1082, %v1087
    %v1089 = vadd.f32 %v1083, %v1087
    %v1090 = vmax.f32 %v1088, 0.0
    %v1091 = vmax.f32 %v1089, 0.0
    %v1092 = vpack.c.bf16 %v1091, %v1090
    %1093 = vmatprep.subr.bf16.mxu0 0
    %1094 = vmatpush1.bf16.msra.mxu0 %v1092
    %1095 = vmatprep.subr.bf16.mxu0 0
    %1096 = vmatpush1.bf16.msra.mxu0 0
    %1097 = vmatprep.subr.bf16.mxu0 0
    %1098 = vmatpush1.bf16.msra.mxu0 0
    %1099 = vmatprep.subr.bf16.mxu0 0
    %1100 = vmatpush1.bf16.msra.mxu0 0
    %1101 = vmatprep.subr.bf16.mxu0 0
    %1102 = vmatpush1.bf16.msra.mxu0 0
    %1103 = vmatprep.subr.bf16.mxu0 0
    %1104 = vmatpush1.bf16.msra.mxu0 0
    %1105 = vmatprep.subr.bf16.mxu0 0
    %1106 = vmatpush1.bf16.msra.mxu0 0
    %1107 = vmatprep.subr.bf16.mxu0 0
    %1108 = vmatpush1.bf16.msra.mxu0 0
    %1109 = vmatprep.subr.bf16.mxu0 0
    %1110 = vmatpush1.bf16.msra.mxu0 0
    %1111 = vmatprep.subr.bf16.mxu0 0
    %1112 = vmatpush1.bf16.msra.mxu0 0
    %1113 = vmatprep.subr.bf16.mxu0 0
    %1114 = vmatpush1.bf16.msra.mxu0 0
    %1115 = vmatprep.subr.bf16.mxu0 0
    %1116 = vmatpush1.bf16.msra.mxu0 0
    %1117 = vmatprep.subr.bf16.mxu0 0
    %1118 = vmatpush1.bf16.msra.mxu0 0
    %1119 = vmatprep.subr.bf16.mxu0 0
    %1120 = vmatpush1.bf16.msra.mxu0 0
    %1121 = vmatprep.subr.bf16.mxu0 0
    %1122 = vmatpush1.bf16.msra.mxu0 0
    %1123 = vmatprep.subr.bf16.mxu0 0
    %1124 = vmatpush1.bf16.msra.mxu0 0
    %1125 = vmatprep.mubr.bf16.mxu0 0
    %1126 = vmatmul.mubr.bf16.gmra.mrb[0].mxu0 %v611
    %v1127 = vpop.f32.mrb[0].mxu0
    %v1128 = vadd.f32 %v584, %v1127
    %v1129 = vpop.f32.mrb[0].mxu0
    %v1130 = vpop.f32.mrb[0].mxu0
    %v1131 = vadd.f32 %v587, %v1130
    %v1132 = vpop.f32.mrb[0].mxu0
    %1133 = vmatprep.mubr.bf16.mxu0 0
    %1134 = vmatmul.mubr.bf16.gmra.mrb[0].mxu0 %v614
    %v1135 = vpop.f32.mrb[0].mxu0
    %v1136 = vadd.f32 %v592, %v1135
    %v1137 = vpop.f32.mrb[0].mxu0
    %v1138 = vpop.f32.mrb[0].mxu0
    %v1139 = vadd.f32 %v595, %v1138
    %v1140 = vpop.f32.mrb[0].mxu0
    %1141 = vdwg.mxu0
    %v1142 = vmax.f32 %v1128, 0.0
    %v1143 = vmax.f32 %v1131, 0.0
    %v1144 = vmax.f32 %v1136, 0.0
    %v1145 = vmax.f32 %v1139, 0.0
    %v1146 = vadd.f32 %v1142, 1e-07
    %v1147 = vadd.f32 %v1143, 1e-07
    %v1148 = vadd.f32 %v1144, 1e-07
    %v1149 = vadd.f32 %v1145, 1e-07
    %v1150 = vmax.f32 %v1146, %v1147
    %v1151 = vmax.f32 %v1148, %v1149
    %v1152 = vmax.f32 %v1150, %v1151
    %v1153 = vrot.slane %v1152, 4
    %v1154 = vmax.f32 %v1152, %v1153
    %v1155 = vrot.slane %v1154, 2
    %v1156 = vmax.f32 %v1154, %v1155
    %v1157 = vrot.slane %v1156, 1
    %v1158 = vmax.f32 %v1156, %v1157
    %v1159 = vsub.f32 %v1146, %v1158
    %v1160 = vsub.f32 %v1147, %v1158
    %v1161 = vsub.f32 %v1148, %v1158
    %v1162 = vsub.f32 %v1149, %v1158
    %v1163 = vmul.f32 %v1159, 1.442695
    %v1164 = vpow.pop %v1163
    %v1165 = vmul.f32 %v1160, 1.442695
    %v1166 = vpow.pop %v1165
    %v1167 = vmul.f32 %v1161, 1.442695
    %v1168 = vpow.pop %v1167
    %v1169 = vmul.f32 %v1162, 1.442695
    %v1170 = vpow.pop %v1169
    %v1171 = vmul.f32 %v1164, %v1146
    %v1172 = vmul.f32 %v1166, %v1147
    %v1173 = vmul.f32 %v1168, %v1148
    %v1174 = vmul.f32 %v1170, %v1149
    %v1175 = vsel %vm88, %v1171, 0.0
    %v1176 = vsel %vm88, %v1172, 0.0
    %v1177 = vsel %vm88, %v1173, 0.0
    %v1178 = vsel %vm88, %v1174, 0.0
    %v1179 = vsel %vm88, %v1164, 0.0
    %v1180 = vsel %vm88, %v1166, 0.0
    %v1181 = vsel %vm88, %v1168, 0.0
    %v1182 = vsel %vm88, %v1170, 0.0
    %1183 = vrot.lane.b32.xlu0 %v1179, 32
    %v1184 = vpop.permute.xlu0 %1183
    %1185 = vrot.lane.b32.xlu0 %v1180, 32
    %v1186 = vpop.permute.xlu0 %1185
    %1187 = vrot.lane.b32.xlu0 %v1181, 32
    %v1188 = vpop.permute.xlu0 %1187
    %1189 = vrot.lane.b32.xlu0 %v1182, 32
    %v1190 = vpop.permute.xlu0 %1189
    %v1191 = vadd.f32 %v1175, %v1184
    %v1192 = vadd.f32 %v1176, %v1186
    %v1193 = vadd.f32 %v1177, %v1188
    %v1194 = vadd.f32 %v1178, %v1190
    %v1195 = vpack.c.bf16 %v1192, %v1191
    %v1196 = vpack.c.bf16 %v1194, %v1193
    %1197 = vmatprep.subr.bf16.mxu0 0
    %1198 = vmatpush1.bf16.msra.mxu0 %v1195
    %1199 = vmatprep.subr.bf16.mxu0 0
    %1200 = vmatpush1.bf16.msra.mxu0 %v1196
    %1201 = vmatprep.subr.bf16.mxu0 0
    %1202 = vmatpush1.bf16.msra.mxu0 0
    %1203 = vmatprep.subr.bf16.mxu0 0
    %1204 = vmatpush1.bf16.msra.mxu0 0
    %1205 = vmatprep.subr.bf16.mxu0 0
    %1206 = vmatpush1.bf16.msra.mxu0 0
    %1207 = vmatprep.subr.bf16.mxu0 0
    %1208 = vmatpush1.bf16.msra.mxu0 0
    %1209 = vmatprep.subr.bf16.mxu0 0
    %1210 = vmatpush1.bf16.msra.mxu0 0
    %1211 = vmatprep.subr.bf16.mxu0 0
    %1212 = vmatpush1.bf16.msra.mxu0 0
    %1213 = vmatprep.subr.bf16.mxu0 0
    %1214 = vmatpush1.bf16.msra.mxu0 0
    %1215 = vmatprep.subr.bf16.mxu0 0
    %1216 = vmatpush1.bf16.msra.mxu0 0
    %1217 = vmatprep.subr.bf16.mxu0 0
    %1218 = vmatpush1.bf16.msra.mxu0 0
    %1219 = vmatprep.subr.bf16.mxu0 0
    %1220 = vmatpush1.bf16.msra.mxu0 0
    %1221 = vmatprep.subr.bf16.mxu0 0
    %1222 = vmatpush1.bf16.msra.mxu0 0
    %1223 = vmatprep.subr.bf16.mxu0 0
    %1224 = vmatpush1.bf16.msra.mxu0 0
    %1225 = vmatprep.subr.bf16.mxu0 0
    %1226 = vmatpush1.bf16.msra.mxu0 0
    %1227 = vmatprep.subr.bf16.mxu0 0
    %1228 = vmatpush1.bf16.msra.mxu0 0
    %1229 = vmatprep.mubr.bf16.mxu0 0
    %1230 = vmatmul.mubr.bf16.gmra.mrb[0].mxu0 %v727
    %v1231 = vpop.f32.mrb[0].mxu0
    %v1232 = vadd.f32 0.0, %v1231
    %v1233 = vpop.f32.mrb[0].mxu0
    %v1234 = vpop.f32.mrb[0].mxu0
    %v1235 = vadd.f32 0.0, %v1234
    %v1236 = vpop.f32.mrb[0].mxu0
    %1237 = vdwg.mxu0
    %1238 = vrot.lane.b32.xlu0 %v1232, 96
    %v1239 = vpop.permute.xlu0 %1238
    %1240 = vrot.lane.b32.xlu0 %v1235, 96
    %v1241 = vpop.permute.xlu0 %1240
    %v1242 = vadd.f32 %v1239, 1e-16
    %v1243 = vadd.f32 %v1241, 1e-16
    %v1244 = vrcp.pop %v1242
    %v1245 = vrcp.pop %v1243
    %v1246 = vmul.f32 %v1232, %v1244
    %v1247 = vmul.f32 %v1235, %v1245
    %v1248 = vsel %vm88, %v1246, 0.0
    %v1249 = vsel %vm88, %v1247, 0.0
    %v1250 = vadd.f32 %v1248, %v1090
    %v1251 = vadd.f32 %v1249, %v1091
    %v1252 = vpack.c.bf16 %v1251, %v1250
    %s1253 = scalar_lea.vmem [#allocation8], 384
    %v1254 = vld [vmem:[%s1253] sm:$0xf]
    %v1255 = vld [vmem:[%s1253 + $0x4] sm:$0xf]
    %v1256 = vld [vmem:[%s1253 + $0x8] sm:$0xf]
    %v1257 = vld [vmem:[%s1253 + $0xc] sm:$0xf]
    %v1258 = vld [vmem:[%s1253 + $0x10] sm:$0xf]
    %v1259 = vld [vmem:[%s1253 + $0x14] sm:$0xf]
    %v1260 = vld [vmem:[%s1253 + $0x18] sm:$0xf]
    %v1261 = vld [vmem:[%s1253 + $0x1c] sm:$0xf]
    %v1262 = vld [vmem:[%s1253 + $0x20] sm:$0xf]
    %v1263 = vld [vmem:[%s1253 + $0x24] sm:$0xf]
    %v1264 = vld [vmem:[%s1253 + $0x28] sm:$0xf]
    %v1265 = vld [vmem:[%s1253 + $0x2c] sm:$0xf]
    %v1266 = vld [vmem:[%s1253 + $0x30] sm:$0xf]
    %v1267 = vld [vmem:[%s1253 + $0x34] sm:$0xf]
    %v1268 = vld [vmem:[%s1253 + $0x38] sm:$0xf]
    %v1269 = vld [vmem:[%s1253 + $0x3c] sm:$0xf]
    %v1270 = vld [vmem:[%s5 + $0x10] sm:$0x1]
    %v1271 = vlaneseq
    %v1272 = vshrl.u32 %v1271, 7
    %v1273 = vsub.s32 0, %v1272
    %v1274 = vrot.slane %v1270, %v1273
    %v1291 = vunpack.c.l.b16 %v1254
    %v1292 = vunpack.c.l.b16 %v1255
    %v1293 = vunpack.c.l.b16 %v1256
    %v1294 = vunpack.c.l.b16 %v1257
    %v1295 = vunpack.c.l.b16 %v1258
    %v1296 = vunpack.c.l.b16 %v1259
    %v1297 = vunpack.c.l.b16 %v1260
    %v1298 = vunpack.c.l.b16 %v1261
    %v1299 = vunpack.c.l.b16 %v1262
    %v1300 = vunpack.c.l.b16 %v1263
    %v1301 = vunpack.c.l.b16 %v1264
    %v1302 = vunpack.c.l.b16 %v1265
    %v1303 = vunpack.c.l.b16 %v1266
    %v1304 = vunpack.c.l.b16 %v1267
    %v1305 = vunpack.c.l.b16 %v1268
    %v1306 = vunpack.c.l.b16 %v1269
    %v1307 = vpack.c.b16 %v1292, %v1291
    %v1308 = vpack.c.b16 %v1294, %v1293
    %v1309 = vpack.c.b16 %v1296, %v1295
    %v1310 = vpack.c.b16 %v1298, %v1297
    %v1311 = vpack.c.b16 %v1300, %v1299
    %v1312 = vpack.c.b16 %v1302, %v1301
    %v1313 = vpack.c.b16 %v1304, %v1303
    %v1314 = vpack.c.b16 %v1306, %v1305
    %1323 = vmatprep.subr.bf16.mxu0 0
    %1324 = vmatpush1.bf16.msra.mxu0 %v1307
    %1325 = vmatprep.subr.bf16.mxu0 0
    %1326 = vmatpush1.bf16.msra.mxu0 %v1308
    %1327 = vmatprep.subr.bf16.mxu0 0
    %1328 = vmatpush1.bf16.msra.mxu0 %v1309
    %1329 = vmatprep.subr.bf16.mxu0 0
    %1330 = vmatpush1.bf16.msra.mxu0 %v1310
    %1331 = vmatprep.subr.bf16.mxu0 0
    %1332 = vmatpush1.bf16.msra.mxu0 %v1311
    %1333 = vmatprep.subr.bf16.mxu0 0
    %1334 = vmatpush1.bf16.msra.mxu0 %v1312
    %1335 = vmatprep.subr.bf16.mxu0 0
    %1336 = vmatpush1.bf16.msra.mxu0 %v1313
    %1337 = vmatprep.subr.bf16.mxu0 0
    %1338 = vmatpush1.bf16.msra.mxu0 %v1314
    %1339 = vmatprep.subr.bf16.mxu0 0
    %1340 = vmatpush1.bf16.msra.mxu0 0
    %1341 = vmatprep.subr.bf16.mxu0 0
    %1342 = vmatpush1.bf16.msra.mxu0 0
    %1343 = vmatprep.subr.bf16.mxu0 0
    %1344 = vmatpush1.bf16.msra.mxu0 0
    %1345 = vmatprep.subr.bf16.mxu0 0
    %1346 = vmatpush1.bf16.msra.mxu0 0
    %1347 = vmatprep.subr.bf16.mxu0 0
    %1348 = vmatpush1.bf16.msra.mxu0 0
    %1349 = vmatprep.subr.bf16.mxu0 0
    %1350 = vmatpush1.bf16.msra.mxu0 0
    %1351 = vmatprep.subr.bf16.mxu0 0
    %1352 = vmatpush1.bf16.msra.mxu0 0
    %1353 = vmatprep.subr.bf16.mxu0 0
    %1354 = vmatpush1.bf16.msra.mxu0 0
    %1355 = vmatprep.mubr.bf16.mxu0 0
    %1356 = vmatmul.mubr.bf16.gmra.mrb[0].mxu0 %v1252
    %v1357 = vpop.f32.mrb[0].mxu0
    %v1358 = vadd.f32 %v1274, %v1357
    %v1359 = vpop.f32.mrb[0].mxu0
    %v1360 = vpop.f32.mrb[0].mxu0
    %v1361 = vadd.f32 %v1274, %v1360
    %v1362 = vpop.f32.mrb[0].mxu0
    %1363 = vdwg.mxu0
    %v1364 = vld [vmem:[%s5 + $0x11] sm:$0x1]
    %v1365 = vld [vmem:[%s5 + $0x12] sm:$0x1]
    %1366 = vadd.xlane.f32.xlu0 %v1358
    %v1367 = vpop.xlane.xlu0 %1366
    %1368 = vadd.xlane.f32.xlu0 %v1361
    %v1369 = vpop.xlane.xlu0 %1368
    %v1370 = vmul.f32 %v1367, 0.015625
    %v1371 = vmul.f32 %v1369, 0.015625
    %v1372 = vmul.f32 %v1358, %v1358
    %v1373 = vmul.f32 %v1361, %v1361
    %1374 = vadd.xlane.f32.xlu0 %v1372
    %v1375 = vpop.xlane.xlu0 %1374
    %1376 = vadd.xlane.f32.xlu0 %v1373
    %v1377 = vpop.xlane.xlu0 %1376
    %v1378 = vmul.f32 %v1375, 0.015625
    %v1379 = vmul.f32 %v1377, 0.015625
    %v1380 = vmul.f32 %v1370, %v1370
    %v1381 = vmul.f32 %v1371, %v1371
    %v1382 = vsub.f32 %v1378, %v1380
    %v1383 = vsub.f32 %v1379, %v1381
    %v1384 = vsub.f32 %v1358, %v1370
    %v1385 = vsub.f32 %v1361, %v1371
    %v1386 = vadd.f32 %v1382, 1e-05
    %v1387 = vadd.f32 %v1383, 1e-05
    %v1388 = vrsqrt.pop %v1386
    %v1389 = vrsqrt.pop %v1387
    %v1390 = vmul.f32 %v1384, %v1388
    %v1391 = vmul.f32 %v1385, %v1389
    %v1392 = vlaneseq
    %v1393 = vshrl.u32 %v1392, 7
    %v1394 = vsub.s32 0, %v1393
    %v1395 = vrot.slane %v1364, %v1394
    %v1396 = vmul.f32 %v1390, %v1395
    %v1397 = vmul.f32 %v1391, %v1395
    %v1398 = vlaneseq
    %v1399 = vshrl.u32 %v1398, 7
    %v1400 = vsub.s32 0, %v1399
    %v1401 = vrot.slane %v1365, %v1400
    %v1402 = vadd.f32 %v1396, %v1401
    %v1403 = vadd.f32 %v1397, %v1401
    %v1404 = vmax.f32 %v1402, 0.0
    %v1405 = vmax.f32 %v1403, 0.0
    %v1406 = vpack.c.bf16 %v1405, %v1404
    %s1407 = scalar_lea.vmem [#allocation8], 448
    %v1408 = vld [vmem:[%s1407] sm:$0xf]
    %v1409 = vld [vmem:[%s1407 + $0x4] sm:$0xf]
    %v1410 = vld [vmem:[%s1407 + $0x8] sm:$0xf]
    %v1411 = vld [vmem:[%s1407 + $0xc] sm:$0xf]
    %v1412 = vld [vmem:[%s1407 + $0x10] sm:$0xf]
    %v1413 = vld [vmem:[%s1407 + $0x14] sm:$0xf]
    %v1414 = vld [vmem:[%s1407 + $0x18] sm:$0xf]
    %v1415 = vld [vmem:[%s1407 + $0x1c] sm:$0xf]
    %v1416 = vld [vmem:[%s1407 + $0x20] sm:$0xf]
    %v1417 = vld [vmem:[%s1407 + $0x24] sm:$0xf]
    %v1418 = vld [vmem:[%s1407 + $0x28] sm:$0xf]
    %v1419 = vld [vmem:[%s1407 + $0x2c] sm:$0xf]
    %v1420 = vld [vmem:[%s1407 + $0x30] sm:$0xf]
    %v1421 = vld [vmem:[%s1407 + $0x34] sm:$0xf]
    %v1422 = vld [vmem:[%s1407 + $0x38] sm:$0xf]
    %v1423 = vld [vmem:[%s1407 + $0x3c] sm:$0xf]
    %v1424 = vld [vmem:[%s5 + $0x13] sm:$0x1]
    %v1425 = vlaneseq
    %v1426 = vshrl.u32 %v1425, 7
    %v1427 = vsub.s32 0, %v1426
    %v1428 = vrot.slane %v1424, %v1427
    %v1445 = vunpack.c.l.b16 %v1408
    %v1446 = vunpack.c.l.b16 %v1409
    %v1447 = vunpack.c.l.b16 %v1410
    %v1448 = vunpack.c.l.b16 %v1411
    %v1449 = vunpack.c.l.b16 %v1412
    %v1450 = vunpack.c.l.b16 %v1413
    %v1451 = vunpack.c.l.b16 %v1414
    %v1452 = vunpack.c.l.b16 %v1415
    %v1453 = vunpack.c.l.b16 %v1416
    %v1454 = vunpack.c.l.b16 %v1417
    %v1455 = vunpack.c.l.b16 %v1418
    %v1456 = vunpack.c.l.b16 %v1419
    %v1457 = vunpack.c.l.b16 %v1420
    %v1458 = vunpack.c.l.b16 %v1421
    %v1459 = vunpack.c.l.b16 %v1422
    %v1460 = vunpack.c.l.b16 %v1423
    %v1461 = vpack.c.b16 %v1446, %v1445
    %v1462 = vpack.c.b16 %v1448, %v1447
    %v1463 = vpack.c.b16 %v1450, %v1449
    %v1464 = vpack.c.b16 %v1452, %v1451
    %v1465 = vpack.c.b16 %v1454, %v1453
    %v1466 = vpack.c.b16 %v1456, %v1455
    %v1467 = vpack.c.b16 %v1458, %v1457
    %v1468 = vpack.c.b16 %v1460, %v1459
    %1477 = vmatprep.subr.bf16.mxu0 0
    %1478 = vmatpush1.bf16.msra.mxu0 %v1461
    %1479 = vmatprep.subr.bf16.mxu0 0
    %1480 = vmatpush1.bf16.msra.mxu0 %v1462
    %1481 = vmatprep.subr.bf16.mxu0 0
    %1482 = vmatpush1.bf16.msra.mxu0 %v1463
    %1483 = vmatprep.subr.bf16.mxu0 0
    %1484 = vmatpush1.bf16.msra.mxu0 %v1464
    %1485 = vmatprep.subr.bf16.mxu0 0
    %1486 = vmatpush1.bf16.msra.mxu0 %v1465
    %1487 = vmatprep.subr.bf16.mxu0 0
    %1488 = vmatpush1.bf16.msra.mxu0 %v1466
    %1489 = vmatprep.subr.bf16.mxu0 0
    %1490 = vmatpush1.bf16.msra.mxu0 %v1467
    %1491 = vmatprep.subr.bf16.mxu0 0
    %1492 = vmatpush1.bf16.msra.mxu0 %v1468
    %1493 = vmatprep.subr.bf16.mxu0 0
    %1494 = vmatpush1.bf16.msra.mxu0 0
    %1495 = vmatprep.subr.bf16.mxu0 0
    %1496 = vmatpush1.bf16.msra.mxu0 0
    %1497 = vmatprep.subr.bf16.mxu0 0
    %1498 = vmatpush1.bf16.msra.mxu0 0
    %1499 = vmatprep.subr.bf16.mxu0 0
    %1500 = vmatpush1.bf16.msra.mxu0 0
    %1501 = vmatprep.subr.bf16.mxu0 0
    %1502 = vmatpush1.bf16.msra.mxu0 0
    %1503 = vmatprep.subr.bf16.mxu0 0
    %1504 = vmatpush1.bf16.msra.mxu0 0
    %1505 = vmatprep.subr.bf16.mxu0 0
    %1506 = vmatpush1.bf16.msra.mxu0 0
    %1507 = vmatprep.subr.bf16.mxu0 0
    %1508 = vmatpush1.bf16.msra.mxu0 0
    %1509 = vmatprep.mubr.bf16.mxu0 0
    %1510 = vmatmul.mubr.bf16.gmra.mrb[0].mxu0 %v1406
    %v1511 = vpop.f32.mrb[0].mxu0
    %v1512 = vadd.f32 %v1428, %v1511
    %v1513 = vpop.f32.mrb[0].mxu0
    %v1514 = vpop.f32.mrb[0].mxu0
    %v1515 = vadd.f32 %v1428, %v1514
    %v1516 = vpop.f32.mrb[0].mxu0
    %1517 = vdwg.mxu0
    %v1518 = vadd.f32 %v1044, %v1512
    %v1519 = vadd.f32 %v1047, %v1515
    %v1520 = vld [vmem:[%s5 + $0x14] sm:$0x1]
    %v1521 = vld [vmem:[%s5 + $0x15] sm:$0x1]
    %1522 = vadd.xlane.f32.xlu0 %v1518
    %v1523 = vpop.xlane.xlu0 %1522
    %1524 = vadd.xlane.f32.xlu0 %v1519
    %v1525 = vpop.xlane.xlu0 %1524
    %v1526 = vmul.f32 %v1523, 0.03125
    %v1527 = vmul.f32 %v1525, 0.03125
    %v1528 = vmul.f32 %v1518, %v1518
    %v1529 = vmul.f32 %v1519, %v1519
    %1530 = vadd.xlane.f32.xlu0 %v1528
    %v1531 = vpop.xlane.xlu0 %1530
    %1532 = vadd.xlane.f32.xlu0 %v1529
    %v1533 = vpop.xlane.xlu0 %1532
    %v1534 = vmul.f32 %v1531, 0.03125
    %v1535 = vmul.f32 %v1533, 0.03125
    %v1536 = vmul.f32 %v1526, %v1526
    %v1537 = vmul.f32 %v1527, %v1527
    %v1538 = vsub.f32 %v1534, %v1536
    %v1539 = vsub.f32 %v1535, %v1537
    %v1540 = vsub.f32 %v1518, %v1526
    %v1541 = vsub.f32 %v1519, %v1527
    %v1542 = vadd.f32 %v1538, 1e-05
    %v1543 = vadd.f32 %v1539, 1e-05
    %v1544 = vrsqrt.pop %v1542
    %v1545 = vrsqrt.pop %v1543
    %v1546 = vmul.f32 %v1540, %v1544
    %v1547 = vmul.f32 %v1541, %v1545
    %v1548 = vlaneseq
    %v1549 = vshrl.u32 %v1548, 7
    %v1550 = vsub.s32 0, %v1549
    %v1551 = vrot.slane %v1520, %v1550
    %v1552 = vmul.f32 %v1546, %v1551
    %v1553 = vmul.f32 %v1547, %v1551
    %v1554 = vlaneseq
    %v1555 = vshrl.u32 %v1554, 7
    %v1556 = vsub.s32 0, %v1555
    %v1557 = vrot.slane %v1521, %v1556
    %v1558 = vadd.f32 %v1552, %v1557
    %v1559 = vadd.f32 %v1553, %v1557
    %v1560 = vmax.f32 %v1558, 0.0
    %v1561 = vmax.f32 %v1559, 0.0
    %v1562 = vpack.c.bf16 %v1561, %v1560
    %1563 = vmatprep.subr.bf16.mxu0 0
    %1564 = vmatpush1.bf16.msra.mxu0 %v1562
    %1565 = vmatprep.subr.bf16.mxu0 0
    %1566 = vmatpush1.bf16.msra.mxu0 0
    %1567 = vmatprep.subr.bf16.mxu0 0
    %1568 = vmatpush1.bf16.msra.mxu0 0
    %1569 = vmatprep.subr.bf16.mxu0 0
    %1570 = vmatpush1.bf16.msra.mxu0 0
    %1571 = vmatprep.subr.bf16.mxu0 0
    %1572 = vmatpush1.bf16.msra.mxu0 0
    %1573 = vmatprep.subr.bf16.mxu0 0
    %1574 = vmatpush1.bf16.msra.mxu0 0
    %1575 = vmatprep.subr.bf16.mxu0 0
    %1576 = vmatpush1.bf16.msra.mxu0 0
    %1577 = vmatprep.subr.bf16.mxu0 0
    %1578 = vmatpush1.bf16.msra.mxu0 0
    %1579 = vmatprep.subr.bf16.mxu0 0
    %1580 = vmatpush1.bf16.msra.mxu0 0
    %1581 = vmatprep.subr.bf16.mxu0 0
    %1582 = vmatpush1.bf16.msra.mxu0 0
    %1583 = vmatprep.subr.bf16.mxu0 0
    %1584 = vmatpush1.bf16.msra.mxu0 0
    %1585 = vmatprep.subr.bf16.mxu0 0
    %1586 = vmatpush1.bf16.msra.mxu0 0
    %1587 = vmatprep.subr.bf16.mxu0 0
    %1588 = vmatpush1.bf16.msra.mxu0 0
    %1589 = vmatprep.subr.bf16.mxu0 0
    %1590 = vmatpush1.bf16.msra.mxu0 0
    %1591 = vmatprep.subr.bf16.mxu0 0
    %1592 = vmatpush1.bf16.msra.mxu0 0
    %1593 = vmatprep.subr.bf16.mxu0 0
    %1594 = vmatpush1.bf16.msra.mxu0 0
    %1595 = vmatprep.mubr.bf16.mxu0 0
    %1596 = vmatmul.mubr.bf16.gmra.mrb[0].mxu0 %v611
    %v1597 = vpop.f32.mrb[0].mxu0
    %v1598 = vadd.f32 %v584, %v1597
    %v1599 = vpop.f32.mrb[0].mxu0
    %v1600 = vpop.f32.mrb[0].mxu0
    %v1601 = vadd.f32 %v587, %v1600
    %v1602 = vpop.f32.mrb[0].mxu0
    %1603 = vmatprep.mubr.bf16.mxu0 0
    %1604 = vmatmul.mubr.bf16.gmra.mrb[0].mxu0 %v614
    %v1605 = vpop.f32.mrb[0].mxu0
    %v1606 = vadd.f32 %v592, %v1605
    %v1607 = vpop.f32.mrb[0].mxu0
    %v1608 = vpop.f32.mrb[0].mxu0
    %v1609 = vadd.f32 %v595, %v1608
    %v1610 = vpop.f32.mrb[0].mxu0
    %1611 = vdwg.mxu0
    %v1612 = vmax.f32 %v1598, 0.0
    %v1613 = vmax.f32 %v1601, 0.0
    %v1614 = vmax.f32 %v1606, 0.0
    %v1615 = vmax.f32 %v1609, 0.0
    %v1616 = vadd.f32 %v1612, 1e-07
    %v1617 = vadd.f32 %v1613, 1e-07
    %v1618 = vadd.f32 %v1614, 1e-07
    %v1619 = vadd.f32 %v1615, 1e-07
    %v1620 = vmax.f32 %v1616, %v1617
    %v1621 = vmax.f32 %v1618, %v1619
    %v1622 = vmax.f32 %v1620, %v1621
    %v1623 = vrot.slane %v1622, 4
    %v1624 = vmax.f32 %v1622, %v1623
    %v1625 = vrot.slane %v1624, 2
    %v1626 = vmax.f32 %v1624, %v1625
    %v1627 = vrot.slane %v1626, 1
    %v1628 = vmax.f32 %v1626, %v1627
    %v1629 = vsub.f32 %v1616, %v1628
    %v1630 = vsub.f32 %v1617, %v1628
    %v1631 = vsub.f32 %v1618, %v1628
    %v1632 = vsub.f32 %v1619, %v1628
    %v1633 = vmul.f32 %v1629, 1.442695
    %v1634 = vpow.pop %v1633
    %v1635 = vmul.f32 %v1630, 1.442695
    %v1636 = vpow.pop %v1635
    %v1637 = vmul.f32 %v1631, 1.442695
    %v1638 = vpow.pop %v1637
    %v1639 = vmul.f32 %v1632, 1.442695
    %v1640 = vpow.pop %v1639
    %v1641 = vmul.f32 %v1634, %v1616
    %v1642 = vmul.f32 %v1636, %v1617
    %v1643 = vmul.f32 %v1638, %v1618
    %v1644 = vmul.f32 %v1640, %v1619
    %v1645 = vsel %vm88, %v1641, 0.0
    %v1646 = vsel %vm88, %v1642, 0.0
    %v1647 = vsel %vm88, %v1643, 0.0
    %v1648 = vsel %vm88, %v1644, 0.0
    %v1649 = vsel %vm88, %v1634, 0.0
    %v1650 = vsel %vm88, %v1636, 0.0
    %v1651 = vsel %vm88, %v1638, 0.0
    %v1652 = vsel %vm88, %v1640, 0.0
    %1653 = vrot.lane.b32.xlu0 %v1649, 32
    %v1654 = vpop.permute.xlu0 %1653
    %1655 = vrot.lane.b32.xlu0 %v1650, 32
    %v1656 = vpop.permute.xlu0 %1655
    %1657 = vrot.lane.b32.xlu0 %v1651, 32
    %v1658 = vpop.permute.xlu0 %1657
    %1659 = vrot.lane.b32.xlu0 %v1652, 32
    %v1660 = vpop.permute.xlu0 %1659
    %v1661 = vadd.f32 %v1645, %v1654
    %v1662 = vadd.f32 %v1646, %v1656
    %v1663 = vadd.f32 %v1647, %v1658
    %v1664 = vadd.f32 %v1648, %v1660
    %v1665 = vpack.c.bf16 %v1662, %v1661
    %v1666 = vpack.c.bf16 %v1664, %v1663
    %1667 = vmatprep.subr.bf16.mxu0 0
    %1668 = vmatpush1.bf16.msra.mxu0 %v1665
    %1669 = vmatprep.subr.bf16.mxu0 0
    %1670 = vmatpush1.bf16.msra.mxu0 %v1666
    %1671 = vmatprep.subr.bf16.mxu0 0
    %1672 = vmatpush1.bf16.msra.mxu0 0
    %1673 = vmatprep.subr.bf16.mxu0 0
    %1674 = vmatpush1.bf16.msra.mxu0 0
    %1675 = vmatprep.subr.bf16.mxu0 0
    %1676 = vmatpush1.bf16.msra.mxu0 0
    %1677 = vmatprep.subr.bf16.mxu0 0
    %1678 = vmatpush1.bf16.msra.mxu0 0
    %1679 = vmatprep.subr.bf16.mxu0 0
    %1680 = vmatpush1.bf16.msra.mxu0 0
    %1681 = vmatprep.subr.bf16.mxu0 0
    %1682 = vmatpush1.bf16.msra.mxu0 0
    %1683 = vmatprep.subr.bf16.mxu0 0
    %1684 = vmatpush1.bf16.msra.mxu0 0
    %1685 = vmatprep.subr.bf16.mxu0 0
    %1686 = vmatpush1.bf16.msra.mxu0 0
    %1687 = vmatprep.subr.bf16.mxu0 0
    %1688 = vmatpush1.bf16.msra.mxu0 0
    %1689 = vmatprep.subr.bf16.mxu0 0
    %1690 = vmatpush1.bf16.msra.mxu0 0
    %1691 = vmatprep.subr.bf16.mxu0 0
    %1692 = vmatpush1.bf16.msra.mxu0 0
    %1693 = vmatprep.subr.bf16.mxu0 0
    %1694 = vmatpush1.bf16.msra.mxu0 0
    %1695 = vmatprep.subr.bf16.mxu0 0
    %1696 = vmatpush1.bf16.msra.mxu0 0
    %1697 = vmatprep.subr.bf16.mxu0 0
    %1698 = vmatpush1.bf16.msra.mxu0 0
    %1699 = vmatprep.mubr.bf16.mxu0 0
    %1700 = vmatmul.mubr.bf16.gmra.mrb[0].mxu0 %v727
    %v1701 = vpop.f32.mrb[0].mxu0
    %v1702 = vadd.f32 0.0, %v1701
    %v1703 = vpop.f32.mrb[0].mxu0
    %v1704 = vpop.f32.mrb[0].mxu0
    %v1705 = vadd.f32 0.0, %v1704
    %v1706 = vpop.f32.mrb[0].mxu0
    %1707 = vdwg.mxu0
    %1708 = vrot.lane.b32.xlu0 %v1702, 96
    %v1709 = vpop.permute.xlu0 %1708
    %1710 = vrot.lane.b32.xlu0 %v1705, 96
    %v1711 = vpop.permute.xlu0 %1710
    %v1712 = vadd.f32 %v1709, 1e-16
    %v1713 = vadd.f32 %v1711, 1e-16
    %v1714 = vrcp.pop %v1712
    %v1715 = vrcp.pop %v1713
    %v1716 = vmul.f32 %v1702, %v1714
    %v1717 = vmul.f32 %v1705, %v1715
    %v1718 = vsel %vm88, %v1716, 0.0
    %v1719 = vsel %vm88, %v1717, 0.0
    %v1720 = vadd.f32 %v1718, %v1560
    %v1721 = vadd.f32 %v1719, %v1561
    %v1722 = vpack.c.bf16 %v1721, %v1720
    %s1723 = scalar_lea.vmem [#allocation8], 512
    %v1724 = vld [vmem:[%s1723] sm:$0xf]
    %v1725 = vld [vmem:[%s1723 + $0x4] sm:$0xf]
    %v1726 = vld [vmem:[%s1723 + $0x8] sm:$0xf]
    %v1727 = vld [vmem:[%s1723 + $0xc] sm:$0xf]
    %v1728 = vld [vmem:[%s1723 + $0x10] sm:$0xf]
    %v1729 = vld [vmem:[%s1723 + $0x14] sm:$0xf]
    %v1730 = vld [vmem:[%s1723 + $0x18] sm:$0xf]
    %v1731 = vld [vmem:[%s1723 + $0x1c] sm:$0xf]
    %v1732 = vld [vmem:[%s1723 + $0x20] sm:$0xf]
    %v1733 = vld [vmem:[%s1723 + $0x24] sm:$0xf]
    %v1734 = vld [vmem:[%s1723 + $0x28] sm:$0xf]
    %v1735 = vld [vmem:[%s1723 + $0x2c] sm:$0xf]
    %v1736 = vld [vmem:[%s1723 + $0x30] sm:$0xf]
    %v1737 = vld [vmem:[%s1723 + $0x34] sm:$0xf]
    %v1738 = vld [vmem:[%s1723 + $0x38] sm:$0xf]
    %v1739 = vld [vmem:[%s1723 + $0x3c] sm:$0xf]
    %v1740 = vld [vmem:[%s5 + $0x16] sm:$0x1]
    %v1741 = vlaneseq
    %v1742 = vshrl.u32 %v1741, 7
    %v1743 = vsub.s32 0, %v1742
    %v1744 = vrot.slane %v1740, %v1743
    %v1761 = vunpack.c.l.b16 %v1724
    %v1762 = vunpack.c.l.b16 %v1725
    %v1763 = vunpack.c.l.b16 %v1726
    %v1764 = vunpack.c.l.b16 %v1727
    %v1765 = vunpack.c.l.b16 %v1728
    %v1766 = vunpack.c.l.b16 %v1729
    %v1767 = vunpack.c.l.b16 %v1730
    %v1768 = vunpack.c.l.b16 %v1731
    %v1769 = vunpack.c.l.b16 %v1732
    %v1770 = vunpack.c.l.b16 %v1733
    %v1771 = vunpack.c.l.b16 %v1734
    %v1772 = vunpack.c.l.b16 %v1735
    %v1773 = vunpack.c.l.b16 %v1736
    %v1774 = vunpack.c.l.b16 %v1737
    %v1775 = vunpack.c.l.b16 %v1738
    %v1776 = vunpack.c.l.b16 %v1739
    %v1777 = vpack.c.b16 %v1762, %v1761
    %v1778 = vpack.c.b16 %v1764, %v1763
    %v1779 = vpack.c.b16 %v1766, %v1765
    %v1780 = vpack.c.b16 %v1768, %v1767
    %v1781 = vpack.c.b16 %v1770, %v1769
    %v1782 = vpack.c.b16 %v1772, %v1771
    %v1783 = vpack.c.b16 %v1774, %v1773
    %v1784 = vpack.c.b16 %v1776, %v1775
    %1793 = vmatprep.subr.bf16.mxu0 0
    %1794 = vmatpush1.bf16.msra.mxu0 %v1777
    %1795 = vmatprep.subr.bf16.mxu0 0
    %1796 = vmatpush1.bf16.msra.mxu0 %v1778
    %1797 = vmatprep.subr.bf16.mxu0 0
    %1798 = vmatpush1.bf16.msra.mxu0 %v1779
    %1799 = vmatprep.subr.bf16.mxu0 0
    %1800 = vmatpush1.bf16.msra.mxu0 %v1780
    %1801 = vmatprep.subr.bf16.mxu0 0
    %1802 = vmatpush1.bf16.msra.mxu0 %v1781
    %1803 = vmatprep.subr.bf16.mxu0 0
    %1804 = vmatpush1.bf16.msra.mxu0 %v1782
    %1805 = vmatprep.subr.bf16.mxu0 0
    %1806 = vmatpush1.bf16.msra.mxu0 %v1783
    %1807 = vmatprep.subr.bf16.mxu0 0
    %1808 = vmatpush1.bf16.msra.mxu0 %v1784
    %1809 = vmatprep.subr.bf16.mxu0 0
    %1810 = vmatpush1.bf16.msra.mxu0 0
    %1811 = vmatprep.subr.bf16.mxu0 0
    %1812 = vmatpush1.bf16.msra.mxu0 0
    %1813 = vmatprep.subr.bf16.mxu0 0
    %1814 = vmatpush1.bf16.msra.mxu0 0
    %1815 = vmatprep.subr.bf16.mxu0 0
    %1816 = vmatpush1.bf16.msra.mxu0 0
    %1817 = vmatprep.subr.bf16.mxu0 0
    %1818 = vmatpush1.bf16.msra.mxu0 0
    %1819 = vmatprep.subr.bf16.mxu0 0
    %1820 = vmatpush1.bf16.msra.mxu0 0
    %1821 = vmatprep.subr.bf16.mxu0 0
    %1822 = vmatpush1.bf16.msra.mxu0 0
    %1823 = vmatprep.subr.bf16.mxu0 0
    %1824 = vmatpush1.bf16.msra.mxu0 0
    %1825 = vmatprep.mubr.bf16.mxu0 0
    %1826 = vmatmul.mubr.bf16.gmra.mrb[0].mxu0 %v1722
    %v1827 = vpop.f32.mrb[0].mxu0
    %v1828 = vadd.f32 %v1744, %v1827
    %v1829 = vpop.f32.mrb[0].mxu0
    %v1830 = vpop.f32.mrb[0].mxu0
    %v1831 = vadd.f32 %v1744, %v1830
    %v1832 = vpop.f32.mrb[0].mxu0
    %1833 = vdwg.mxu0
    %v1834 = vld [vmem:[%s5 + $0x17] sm:$0x1]
    %v1835 = vld [vmem:[%s5 + $0x18] sm:$0x1]
    %1836 = vadd.xlane.f32.xlu0 %v1828
    %v1837 = vpop.xlane.xlu0 %1836
    %1838 = vadd.xlane.f32.xlu0 %v1831
    %v1839 = vpop.xlane.xlu0 %1838
    %v1840 = vmul.f32 %v1837, 0.015625
    %v1841 = vmul.f32 %v1839, 0.015625
    %v1842 = vmul.f32 %v1828, %v1828
    %v1843 = vmul.f32 %v1831, %v1831
    %1844 = vadd.xlane.f32.xlu0 %v1842
    %v1845 = vpop.xlane.xlu0 %1844
    %1846 = vadd.xlane.f32.xlu0 %v1843
    %v1847 = vpop.xlane.xlu0 %1846
    %v1848 = vmul.f32 %v1845, 0.015625
    %v1849 = vmul.f32 %v1847, 0.015625
    %v1850 = vmul.f32 %v1840, %v1840
    %v1851 = vmul.f32 %v1841, %v1841
    %v1852 = vsub.f32 %v1848, %v1850
    %v1853 = vsub.f32 %v1849, %v1851
    %v1854 = vsub.f32 %v1828, %v1840
    %v1855 = vsub.f32 %v1831, %v1841
    %v1856 = vadd.f32 %v1852, 1e-05
    %v1857 = vadd.f32 %v1853, 1e-05
    %v1858 = vrsqrt.pop %v1856
    %v1859 = vrsqrt.pop %v1857
    %v1860 = vmul.f32 %v1854, %v1858
    %v1861 = vmul.f32 %v1855, %v1859
    %v1862 = vlaneseq
    %v1863 = vshrl.u32 %v1862, 7
    %v1864 = vsub.s32 0, %v1863
    %v1865 = vrot.slane %v1834, %v1864
    %v1866 = vmul.f32 %v1860, %v1865
    %v1867 = vmul.f32 %v1861, %v1865
    %v1868 = vlaneseq
    %v1869 = vshrl.u32 %v1868, 7
    %v1870 = vsub.s32 0, %v1869
    %v1871 = vrot.slane %v1835, %v1870
    %v1872 = vadd.f32 %v1866, %v1871
    %v1873 = vadd.f32 %v1867, %v1871
    %v1874 = vmax.f32 %v1872, 0.0
    %v1875 = vmax.f32 %v1873, 0.0
    %v1876 = vpack.c.bf16 %v1875, %v1874
    %s1877 = scalar_lea.vmem [#allocation8], 576
    %v1878 = vld [vmem:[%s1877] sm:$0xf]
    %v1879 = vld [vmem:[%s1877 + $0x4] sm:$0xf]
    %v1880 = vld [vmem:[%s1877 + $0x8] sm:$0xf]
    %v1881 = vld [vmem:[%s1877 + $0xc] sm:$0xf]
    %v1882 = vld [vmem:[%s1877 + $0x10] sm:$0xf]
    %v1883 = vld [vmem:[%s1877 + $0x14] sm:$0xf]
    %v1884 = vld [vmem:[%s1877 + $0x18] sm:$0xf]
    %v1885 = vld [vmem:[%s1877 + $0x1c] sm:$0xf]
    %v1886 = vld [vmem:[%s1877 + $0x20] sm:$0xf]
    %v1887 = vld [vmem:[%s1877 + $0x24] sm:$0xf]
    %v1888 = vld [vmem:[%s1877 + $0x28] sm:$0xf]
    %v1889 = vld [vmem:[%s1877 + $0x2c] sm:$0xf]
    %v1890 = vld [vmem:[%s1877 + $0x30] sm:$0xf]
    %v1891 = vld [vmem:[%s1877 + $0x34] sm:$0xf]
    %v1892 = vld [vmem:[%s1877 + $0x38] sm:$0xf]
    %v1893 = vld [vmem:[%s1877 + $0x3c] sm:$0xf]
    %v1894 = vld [vmem:[%s5 + $0x19] sm:$0x1]
    %v1895 = vlaneseq
    %v1896 = vshrl.u32 %v1895, 7
    %v1897 = vsub.s32 0, %v1896
    %v1898 = vrot.slane %v1894, %v1897
    %v1915 = vunpack.c.l.b16 %v1878
    %v1916 = vunpack.c.l.b16 %v1879
    %v1917 = vunpack.c.l.b16 %v1880
    %v1918 = vunpack.c.l.b16 %v1881
    %v1919 = vunpack.c.l.b16 %v1882
    %v1920 = vunpack.c.l.b16 %v1883
    %v1921 = vunpack.c.l.b16 %v1884
    %v1922 = vunpack.c.l.b16 %v1885
    %v1923 = vunpack.c.l.b16 %v1886
    %v1924 = vunpack.c.l.b16 %v1887
    %v1925 = vunpack.c.l.b16 %v1888
    %v1926 = vunpack.c.l.b16 %v1889
    %v1927 = vunpack.c.l.b16 %v1890
    %v1928 = vunpack.c.l.b16 %v1891
    %v1929 = vunpack.c.l.b16 %v1892
    %v1930 = vunpack.c.l.b16 %v1893
    %v1931 = vpack.c.b16 %v1916, %v1915
    %v1932 = vpack.c.b16 %v1918, %v1917
    %v1933 = vpack.c.b16 %v1920, %v1919
    %v1934 = vpack.c.b16 %v1922, %v1921
    %v1935 = vpack.c.b16 %v1924, %v1923
    %v1936 = vpack.c.b16 %v1926, %v1925
    %v1937 = vpack.c.b16 %v1928, %v1927
    %v1938 = vpack.c.b16 %v1930, %v1929
    %1947 = vmatprep.subr.bf16.mxu0 0
    %1948 = vmatpush1.bf16.msra.mxu0 %v1931
    %1949 = vmatprep.subr.bf16.mxu0 0
    %1950 = vmatpush1.bf16.msra.mxu0 %v1932
    %1951 = vmatprep.subr.bf16.mxu0 0
    %1952 = vmatpush1.bf16.msra.mxu0 %v1933
    %1953 = vmatprep.subr.bf16.mxu0 0
    %1954 = vmatpush1.bf16.msra.mxu0 %v1934
    %1955 = vmatprep.subr.bf16.mxu0 0
    %1956 = vmatpush1.bf16.msra.mxu0 %v1935
    %1957 = vmatprep.subr.bf16.mxu0 0
    %1958 = vmatpush1.bf16.msra.mxu0 %v1936
    %1959 = vmatprep.subr.bf16.mxu0 0
    %1960 = vmatpush1.bf16.msra.mxu0 %v1937
    %1961 = vmatprep.subr.bf16.mxu0 0
    %1962 = vmatpush1.bf16.msra.mxu0 %v1938
    %1963 = vmatprep.subr.bf16.mxu0 0
    %1964 = vmatpush1.bf16.msra.mxu0 0
    %1965 = vmatprep.subr.bf16.mxu0 0
    %1966 = vmatpush1.bf16.msra.mxu0 0
    %1967 = vmatprep.subr.bf16.mxu0 0
    %1968 = vmatpush1.bf16.msra.mxu0 0
    %1969 = vmatprep.subr.bf16.mxu0 0
    %1970 = vmatpush1.bf16.msra.mxu0 0
    %1971 = vmatprep.subr.bf16.mxu0 0
    %1972 = vmatpush1.bf16.msra.mxu0 0
    %1973 = vmatprep.subr.bf16.mxu0 0
    %1974 = vmatpush1.bf16.msra.mxu0 0
    %1975 = vmatprep.subr.bf16.mxu0 0
    %1976 = vmatpush1.bf16.msra.mxu0 0
    %1977 = vmatprep.subr.bf16.mxu0 0
    %1978 = vmatpush1.bf16.msra.mxu0 0
    %1979 = vmatprep.mubr.bf16.mxu0 0
    %1980 = vmatmul.mubr.bf16.gmra.mrb[0].mxu0 %v1876
    %v1981 = vpop.f32.mrb[0].mxu0
    %v1982 = vadd.f32 %v1898, %v1981
    %v1983 = vpop.f32.mrb[0].mxu0
    %v1984 = vpop.f32.mrb[0].mxu0
    %v1985 = vadd.f32 %v1898, %v1984
    %v1986 = vpop.f32.mrb[0].mxu0
    %1987 = vdwg.mxu0
    %v1988 = vadd.f32 %v1518, %v1982
    %v1989 = vadd.f32 %v1519, %v1985
    %v1990 = vpack.c.bf16 %v1989, %v1988
    %s1991 = scalar_lea.vmem [#allocation8], 640
    %v1992 = vld [vmem:[%s1991] sm:$0xf]
    %v1993 = vld [vmem:[%s1991 + $0x4] sm:$0xf]
    %v1994 = vld [vmem:[%s1991 + $0x8] sm:$0xf]
    %v1995 = vld [vmem:[%s1991 + $0xc] sm:$0xf]
    %v1996 = vld [vmem:[%s1991 + $0x10] sm:$0xf]
    %v1997 = vld [vmem:[%s1991 + $0x14] sm:$0xf]
    %v1998 = vld [vmem:[%s1991 + $0x18] sm:$0xf]
    %v1999 = vld [vmem:[%s1991 + $0x1c] sm:$0xf]
    %v2000 = vld [vmem:[%s1991 + $0x20] sm:$0xf]
    %v2001 = vld [vmem:[%s1991 + $0x24] sm:$0xf]
    %v2002 = vld [vmem:[%s1991 + $0x28] sm:$0xf]
    %v2003 = vld [vmem:[%s1991 + $0x2c] sm:$0xf]
    %v2004 = vld [vmem:[%s1991 + $0x30] sm:$0xf]
    %v2005 = vld [vmem:[%s1991 + $0x34] sm:$0xf]
    %v2006 = vld [vmem:[%s1991 + $0x38] sm:$0xf]
    %v2007 = vld [vmem:[%s1991 + $0x3c] sm:$0xf]
    %v2008 = vld [vmem:[%s5 + $0x1a] sm:$0x1]
    %v2009 = vlaneseq
    %v2010 = vshrl.u32 %v2009, 7
    %v2011 = vsub.s32 0, %v2010
    %v2012 = vrot.slane %v2008, %v2011
    %v2029 = vunpack.c.l.b16 %v1992
    %v2030 = vunpack.c.l.b16 %v1993
    %v2031 = vunpack.c.l.b16 %v1994
    %v2032 = vunpack.c.l.b16 %v1995
    %v2033 = vunpack.c.l.b16 %v1996
    %v2034 = vunpack.c.l.b16 %v1997
    %v2035 = vunpack.c.l.b16 %v1998
    %v2036 = vunpack.c.l.b16 %v1999
    %v2037 = vunpack.c.l.b16 %v2000
    %v2038 = vunpack.c.l.b16 %v2001
    %v2039 = vunpack.c.l.b16 %v2002
    %v2040 = vunpack.c.l.b16 %v2003
    %v2041 = vunpack.c.l.b16 %v2004
    %v2042 = vunpack.c.l.b16 %v2005
    %v2043 = vunpack.c.l.b16 %v2006
    %v2044 = vunpack.c.l.b16 %v2007
    %v2045 = vpack.c.b16 %v2030, %v2029
    %v2046 = vpack.c.b16 %v2032, %v2031
    %v2047 = vpack.c.b16 %v2034, %v2033
    %v2048 = vpack.c.b16 %v2036, %v2035
    %v2049 = vpack.c.b16 %v2038, %v2037
    %v2050 = vpack.c.b16 %v2040, %v2039
    %v2051 = vpack.c.b16 %v2042, %v2041
    %v2052 = vpack.c.b16 %v2044, %v2043
    %2061 = vmatprep.subr.bf16.mxu0 0
    %2062 = vmatpush1.bf16.msra.mxu0 %v2045
    %2063 = vmatprep.subr.bf16.mxu0 0
    %2064 = vmatpush1.bf16.msra.mxu0 %v2046
    %2065 = vmatprep.subr.bf16.mxu0 0
    %2066 = vmatpush1.bf16.msra.mxu0 %v2047
    %2067 = vmatprep.subr.bf16.mxu0 0
    %2068 = vmatpush1.bf16.msra.mxu0 %v2048
    %2069 = vmatprep.subr.bf16.mxu0 0
    %2070 = vmatpush1.bf16.msra.mxu0 %v2049
    %2071 = vmatprep.subr.bf16.mxu0 0
    %2072 = vmatpush1.bf16.msra.mxu0 %v2050
    %2073 = vmatprep.subr.bf16.mxu0 0
    %2074 = vmatpush1.bf16.msra.mxu0 %v2051
    %2075 = vmatprep.subr.bf16.mxu0 0
    %2076 = vmatpush1.bf16.msra.mxu0 %v2052
    %2077 = vmatprep.subr.bf16.mxu0 0
    %2078 = vmatpush1.bf16.msra.mxu0 0
    %2079 = vmatprep.subr.bf16.mxu0 0
    %2080 = vmatpush1.bf16.msra.mxu0 0
    %2081 = vmatprep.subr.bf16.mxu0 0
    %2082 = vmatpush1.bf16.msra.mxu0 0
    %2083 = vmatprep.subr.bf16.mxu0 0
    %2084 = vmatpush1.bf16.msra.mxu0 0
    %2085 = vmatprep.subr.bf16.mxu0 0
    %2086 = vmatpush1.bf16.msra.mxu0 0
    %2087 = vmatprep.subr.bf16.mxu0 0
    %2088 = vmatpush1.bf16.msra.mxu0 0
    %2089 = vmatprep.subr.bf16.mxu0 0
    %2090 = vmatpush1.bf16.msra.mxu0 0
    %2091 = vmatprep.subr.bf16.mxu0 0
    %2092 = vmatpush1.bf16.msra.mxu0 0
    %2093 = vmatprep.mubr.bf16.mxu0 0
    %2094 = vmatmul.mubr.bf16.gmra.mrb[0].mxu0 %v1990
    %v2095 = vpop.f32.mrb[0].mxu0
    %v2096 = vadd.f32 %v2012, %v2095
    %v2097 = vpop.f32.mrb[0].mxu0
    %v2098 = vpop.f32.mrb[0].mxu0
    %v2099 = vadd.f32 %v2012, %v2098
    %v2100 = vpop.f32.mrb[0].mxu0
    %2101 = vdwg.mxu0
    %v2102 = vld [vmem:[%s5 + $0x1b] sm:$0x1]
    %v2103 = vlaneseq
    %v2104 = vshrl.u32 %v2103, 7
    %v2105 = vsub.s32 0, %v2104
    %v2106 = vrot.slane %v2102, %v2105
    %v2107 = vmul.f32 %v2096, %v2106
    %v2108 = vmul.f32 %v2099, %v2106
    %v2109 = vld [vmem:[%s5 + $0x1c] sm:$0x1]
    %v2110 = vlaneseq
    %v2111 = vshrl.u32 %v2110, 7
    %v2112 = vsub.s32 0, %v2111
    %v2113 = vrot.slane %v2109, %v2112
    %v2114 = vadd.f32 %v2107, %v2113
    %v2115 = vadd.f32 %v2108, %v2113
    %v2116 = vmax.f32 %v2114, 0.0
    %v2117 = vmax.f32 %v2115, 0.0
    %v2118 = vpack.c.bf16 %v2117, %v2116
    %s2119 = scalar_lea.vmem [#allocation8], 704
    %v2120 = vld [vmem:[%s2119] sm:$0xf]
    %v2121 = vld [vmem:[%s2119 + $0x4] sm:$0xf]
    %v2122 = vld [vmem:[%s2119 + $0x8] sm:$0xf]
    %v2123 = vld [vmem:[%s2119 + $0xc] sm:$0xf]
    %v2124 = vld [vmem:[%s2119 + $0x10] sm:$0xf]
    %v2125 = vld [vmem:[%s2119 + $0x14] sm:$0xf]
    %v2126 = vld [vmem:[%s2119 + $0x18] sm:$0xf]
    %v2127 = vld [vmem:[%s2119 + $0x1c] sm:$0xf]
    %v2128 = vld [vmem:[%s2119 + $0x20] sm:$0xf]
    %v2129 = vld [vmem:[%s2119 + $0x24] sm:$0xf]
    %v2130 = vld [vmem:[%s2119 + $0x28] sm:$0xf]
    %v2131 = vld [vmem:[%s2119 + $0x2c] sm:$0xf]
    %v2132 = vld [vmem:[%s2119 + $0x30] sm:$0xf]
    %v2133 = vld [vmem:[%s2119 + $0x34] sm:$0xf]
    %v2134 = vld [vmem:[%s2119 + $0x38] sm:$0xf]
    %v2135 = vld [vmem:[%s2119 + $0x3c] sm:$0xf]
    %v2136 = vld [vmem:[%s5 + $0x1d] sm:$0x1]
    %v2137 = vlaneseq
    %v2138 = vshrl.u32 %v2137, 7
    %v2139 = vsub.s32 0, %v2138
    %v2140 = vrot.slane %v2136, %v2139
    %v2157 = vunpack.c.l.b16 %v2120
    %v2158 = vunpack.c.l.b16 %v2121
    %v2159 = vunpack.c.l.b16 %v2122
    %v2160 = vunpack.c.l.b16 %v2123
    %v2161 = vunpack.c.l.b16 %v2124
    %v2162 = vunpack.c.l.b16 %v2125
    %v2163 = vunpack.c.l.b16 %v2126
    %v2164 = vunpack.c.l.b16 %v2127
    %v2165 = vunpack.c.l.b16 %v2128
    %v2166 = vunpack.c.l.b16 %v2129
    %v2167 = vunpack.c.l.b16 %v2130
    %v2168 = vunpack.c.l.b16 %v2131
    %v2169 = vunpack.c.l.b16 %v2132
    %v2170 = vunpack.c.l.b16 %v2133
    %v2171 = vunpack.c.l.b16 %v2134
    %v2172 = vunpack.c.l.b16 %v2135
    %v2173 = vpack.c.b16 %v2158, %v2157
    %v2174 = vpack.c.b16 %v2160, %v2159
    %v2175 = vpack.c.b16 %v2162, %v2161
    %v2176 = vpack.c.b16 %v2164, %v2163
    %v2177 = vpack.c.b16 %v2166, %v2165
    %v2178 = vpack.c.b16 %v2168, %v2167
    %v2179 = vpack.c.b16 %v2170, %v2169
    %v2180 = vpack.c.b16 %v2172, %v2171
    %2189 = vmatprep.subr.bf16.mxu0 0
    %2190 = vmatpush1.bf16.msra.mxu0 %v2173
    %2191 = vmatprep.subr.bf16.mxu0 0
    %2192 = vmatpush1.bf16.msra.mxu0 %v2174
    %2193 = vmatprep.subr.bf16.mxu0 0
    %2194 = vmatpush1.bf16.msra.mxu0 %v2175
    %2195 = vmatprep.subr.bf16.mxu0 0
    %2196 = vmatpush1.bf16.msra.mxu0 %v2176
    %2197 = vmatprep.subr.bf16.mxu0 0
    %2198 = vmatpush1.bf16.msra.mxu0 %v2177
    %2199 = vmatprep.subr.bf16.mxu0 0
    %2200 = vmatpush1.bf16.msra.mxu0 %v2178
    %2201 = vmatprep.subr.bf16.mxu0 0
    %2202 = vmatpush1.bf16.msra.mxu0 %v2179
    %2203 = vmatprep.subr.bf16.mxu0 0
    %2204 = vmatpush1.bf16.msra.mxu0 %v2180
    %2205 = vmatprep.subr.bf16.mxu0 0
    %2206 = vmatpush1.bf16.msra.mxu0 0
    %2207 = vmatprep.subr.bf16.mxu0 0
    %2208 = vmatpush1.bf16.msra.mxu0 0
    %2209 = vmatprep.subr.bf16.mxu0 0
    %2210 = vmatpush1.bf16.msra.mxu0 0
    %2211 = vmatprep.subr.bf16.mxu0 0
    %2212 = vmatpush1.bf16.msra.mxu0 0
    %2213 = vmatprep.subr.bf16.mxu0 0
    %2214 = vmatpush1.bf16.msra.mxu0 0
    %2215 = vmatprep.subr.bf16.mxu0 0
    %2216 = vmatpush1.bf16.msra.mxu0 0
    %2217 = vmatprep.subr.bf16.mxu0 0
    %2218 = vmatpush1.bf16.msra.mxu0 0
    %2219 = vmatprep.subr.bf16.mxu0 0
    %2220 = vmatpush1.bf16.msra.mxu0 0
    %2221 = vmatprep.mubr.bf16.mxu0 0
    %2222 = vmatmul.mubr.bf16.gmra.mrb[0].mxu0 %v2118
    %v2223 = vpop.f32.mrb[0].mxu0
    %v2224 = vadd.f32 %v2140, %v2223
    %v2225 = vpop.f32.mrb[0].mxu0
    %v2226 = vpop.f32.mrb[0].mxu0
    %v2227 = vadd.f32 %v2140, %v2226
    %v2228 = vpop.f32.mrb[0].mxu0
    %2229 = vdwg.mxu0
    %v2230 = vld [vmem:[%s5 + $0x1e] sm:$0x1]
    %v2231 = vlaneseq
    %v2232 = vshrl.u32 %v2231, 7
    %v2233 = vsub.s32 0, %v2232
    %v2234 = vrot.slane %v2230, %v2233
    %v2235 = vmul.f32 %v2224, %v2234
    %v2236 = vmul.f32 %v2227, %v2234
    %v2237 = vld [vmem:[%s5 + $0x1f] sm:$0x1]
    %v2238 = vlaneseq
    %v2239 = vshrl.u32 %v2238, 7
    %v2240 = vsub.s32 0, %v2239
    %v2241 = vrot.slane %v2237, %v2240
    %v2242 = vadd.f32 %v2235, %v2241
    %v2243 = vadd.f32 %v2236, %v2241
    %v2244 = vmax.f32 %v2242, 0.0
    %v2245 = vmax.f32 %v2243, 0.0
    %v2246 = vpack.c.bf16 %v2245, %v2244
    %s2247 = scalar_lea.vmem [#allocation8], 768
    %v2248 = vld [vmem:[%s2247] sm:$0xf]
    %v2249 = vld [vmem:[%s2247 + $0x4] sm:$0xf]
    %v2250 = vld [vmem:[%s2247 + $0x8] sm:$0xf]
    %v2251 = vld [vmem:[%s2247 + $0xc] sm:$0xf]
    %v2252 = vld [vmem:[%s2247 + $0x10] sm:$0xf]
    %v2253 = vld [vmem:[%s2247 + $0x14] sm:$0xf]
    %v2254 = vld [vmem:[%s2247 + $0x18] sm:$0xf]
    %v2255 = vld [vmem:[%s2247 + $0x1c] sm:$0xf]
    %v2256 = vld [vmem:[%s2247 + $0x20] sm:$0xf]
    %v2257 = vld [vmem:[%s2247 + $0x24] sm:$0xf]
    %v2258 = vld [vmem:[%s2247 + $0x28] sm:$0xf]
    %v2259 = vld [vmem:[%s2247 + $0x2c] sm:$0xf]
    %v2260 = vld [vmem:[%s2247 + $0x30] sm:$0xf]
    %v2261 = vld [vmem:[%s2247 + $0x34] sm:$0xf]
    %v2262 = vld [vmem:[%s2247 + $0x38] sm:$0xf]
    %v2263 = vld [vmem:[%s2247 + $0x3c] sm:$0xf]
    %v2264 = vld [vmem:[%s5 + $0x20] sm:$0x1]
    %v2265 = vlaneseq
    %v2266 = vshrl.u32 %v2265, 7
    %v2267 = vsub.s32 0, %v2266
    %v2268 = vrot.slane %v2264, %v2267
    %v2285 = vunpack.c.l.b16 %v2248
    %v2286 = vunpack.c.l.b16 %v2249
    %v2287 = vunpack.c.l.b16 %v2250
    %v2288 = vunpack.c.l.b16 %v2251
    %v2289 = vunpack.c.l.b16 %v2252
    %v2290 = vunpack.c.l.b16 %v2253
    %v2291 = vunpack.c.l.b16 %v2254
    %v2292 = vunpack.c.l.b16 %v2255
    %v2293 = vunpack.c.l.b16 %v2256
    %v2294 = vunpack.c.l.b16 %v2257
    %v2295 = vunpack.c.l.b16 %v2258
    %v2296 = vunpack.c.l.b16 %v2259
    %v2297 = vunpack.c.l.b16 %v2260
    %v2298 = vunpack.c.l.b16 %v2261
    %v2299 = vunpack.c.l.b16 %v2262
    %v2300 = vunpack.c.l.b16 %v2263
    %v2301 = vpack.c.b16 %v2286, %v2285
    %v2302 = vpack.c.b16 %v2288, %v2287
    %v2303 = vpack.c.b16 %v2290, %v2289
    %v2304 = vpack.c.b16 %v2292, %v2291
    %v2305 = vpack.c.b16 %v2294, %v2293
    %v2306 = vpack.c.b16 %v2296, %v2295
    %v2307 = vpack.c.b16 %v2298, %v2297
    %v2308 = vpack.c.b16 %v2300, %v2299
    %2317 = vmatprep.subr.bf16.mxu0 0
    %2318 = vmatpush1.bf16.msra.mxu0 %v2301
    %2319 = vmatprep.subr.bf16.mxu0 0
    %2320 = vmatpush1.bf16.msra.mxu0 %v2302
    %2321 = vmatprep.subr.bf16.mxu0 0
    %2322 = vmatpush1.bf16.msra.mxu0 %v2303
    %2323 = vmatprep.subr.bf16.mxu0 0
    %2324 = vmatpush1.bf16.msra.mxu0 %v2304
    %2325 = vmatprep.subr.bf16.mxu0 0
    %2326 = vmatpush1.bf16.msra.mxu0 %v2305
    %2327 = vmatprep.subr.bf16.mxu0 0
    %2328 = vmatpush1.bf16.msra.mxu0 %v2306
    %2329 = vmatprep.subr.bf16.mxu0 0
    %2330 = vmatpush1.bf16.msra.mxu0 %v2307
    %2331 = vmatprep.subr.bf16.mxu0 0
    %2332 = vmatpush1.bf16.msra.mxu0 %v2308
    %2333 = vmatprep.subr.bf16.mxu0 0
    %2334 = vmatpush1.bf16.msra.mxu0 0
    %2335 = vmatprep.subr.bf16.mxu0 0
    %2336 = vmatpush1.bf16.msra.mxu0 0
    %2337 = vmatprep.subr.bf16.mxu0 0
    %2338 = vmatpush1.bf16.msra.mxu0 0
    %2339 = vmatprep.subr.bf16.mxu0 0
    %2340 = vmatpush1.bf16.msra.mxu0 0
    %2341 = vmatprep.subr.bf16.mxu0 0
    %2342 = vmatpush1.bf16.msra.mxu0 0
    %2343 = vmatprep.subr.bf16.mxu0 0
    %2344 = vmatpush1.bf16.msra.mxu0 0
    %2345 = vmatprep.subr.bf16.mxu0 0
    %2346 = vmatpush1.bf16.msra.mxu0 0
    %2347 = vmatprep.subr.bf16.mxu0 0
    %2348 = vmatpush1.bf16.msra.mxu0 0
    %2349 = vmatprep.mubr.bf16.mxu0 0
    %2350 = vmatmul.mubr.bf16.gmra.mrb[0].mxu0 %v2246
    %v2351 = vpop.f32.mrb[0].mxu0
    %v2352 = vadd.f32 %v2268, %v2351
    %v2353 = vpop.f32.mrb[0].mxu0
    %v2354 = vpop.f32.mrb[0].mxu0
    %v2355 = vadd.f32 %v2268, %v2354
    %v2356 = vpop.f32.mrb[0].mxu0
    %2357 = vdwg.mxu0
    %2358 = vst [vmem:[#allocation10] sm:$0xff] %v2352
    %2359 = vst [vmem:[#allocation10 + $0x8] sm:$0xff] %v2355
    // Predicated region
    $region42: #{tpu_custom_call.1} parent=1 // pred_check
      _
    $region43: #{tpu_custom_call.1} parent=1 // pred_check_branch
      %2361 = sbr.rel (0) target = $region45
    $region44: #{tpu_custom_call.1} parent=1 // pred_region
      %s2363 = ssub.s32 256, 256
      %2364 = vsyncadd [#allocation4], %s2363
      %s2365 = sshll.u32 [#allocation10], 4
      %s2366 = int_to_ptr.vmem [resolvable:$true] %s2365
      %2371 = dma.vmem_to_hbm [thread:$0]  %s2366, 256, %s6, [#allocation4], 128, 128, 8
    $region45: #{tpu_custom_call.1} parent=1 // pred_fallthru
      _
    // Predicated region
    $region46: #{tpu_custom_call.1} parent=1 // pred_check
      _
    $region47: #{tpu_custom_call.1} parent=1 // pred_check_branch
      %2373 = sbr.rel (0) target = $region49
    $region48: #{tpu_custom_call.1} parent=1 // pred_region
      %2374 = dma.done [#allocation4], 256
    $region49: #{tpu_custom_call.1} parent=1 // pred_fallthru
      _
    %2375 = vsyncpa [#allocation3], 1
    %2376 = vsyncpa [#allocation6], 1
    %2377 = vsyncpa [#allocation9], 1
    %2378 = vsyncpa [#allocation4], 1

</llo_original>
